<compile_context>
chip_gen: v5e
topology: v5e:2x2
jax: 0.10.0
libtpu: 0.0.40
codegen_flags: <defaults>
</compile_context>

<pallas_src>
import functools

import jax
import jax.numpy as jnp
from jax.experimental import pallas as pl
from jax.experimental.pallas import tpu as pltpu


# ---------------------------------------------------------------------------
# Fused kernel: n_layers x (hoisted input projection + T recurrent steps)
# + final FC + sigmoid.  Everything stays resident in VMEM.
# ---------------------------------------------------------------------------
def _sentiment_kernel(*refs, n_layers, T, B, H, O, n_last, fc_on_vpu):
    emb_ref = refs[0]                                   # (T*B, E)  (t, b)-row ordered
    h0_ref = refs[1]                                    # (n_layers, B, H)
    c0_ref = refs[2]                                    # (n_layers, B, H)
    wih_refs = refs[3:3 + n_layers]                     # per layer (D_l, 4H), pre-transposed
    whh_refs = refs[3 + n_layers:3 + 2 * n_layers]      # per layer (H, 4H), pre-transposed
    b_refs = refs[3 + 2 * n_layers:3 + 3 * n_layers]    # per layer (1, 4H) = b_ih + b_hh
    fcw_ref = refs[3 + 3 * n_layers]                    # (1, H) if fc_on_vpu else (H, O)
    fcb_ref = refs[4 + 3 * n_layers]                    # (1, O)
    out_ref = refs[5 + 3 * n_layers]                    # (n_last*B, O)
    hn_ref = refs[6 + 3 * n_layers]                     # (n_layers, B, H)
    cn_ref = refs[7 + 3 * n_layers]                     # (n_layers, B, H)
    seq_sc = refs[8 + 3 * n_layers]                     # VMEM scratch (T*B, H)

    for l in range(n_layers):
        w_ih = wih_refs[l][...]                         # (D_l, 4H)
        w_hh = whh_refs[l][...]                         # (H, 4H)

        # Hoisted input projection for the whole sequence: ONE matmul with
        # T*B rows, bias folded in once (off the recurrent dependence chain).
        x_seq = emb_ref[...] if l == 0 else seq_sc[...]  # (T*B, D_l)
        gates_x = jnp.dot(x_seq.astype(w_ih.dtype), w_ih,
                          preferred_element_type=jnp.float32) + b_refs[l][...]

        h = h0_ref[l]                                   # (B, H)
        c = c0_ref[l]                                   # (B, H)

        # Fully unrolled (small, static T).  Per-step chain: one (B,H)x(H,4H)
        # matmul + full-tile sigmoid/tanh (EUP) + elementwise state update.
        for t in range(T):
            gates = gates_x[t * B:(t + 1) * B, :] + jnp.dot(
                h.astype(w_hh.dtype), w_hh, preferred_element_type=jnp.float32)
            sig = jax.nn.sigmoid(gates)                 # full (B, 4H) tile
            tnh = jnp.tanh(gates)
            i_g = sig[:, 0 * H:1 * H]
            f_g = sig[:, 1 * H:2 * H]
            g_g = tnh[:, 2 * H:3 * H]
            o_g = sig[:, 3 * H:4 * H]
            c = f_g * c + i_g * g_g
            h = o_g * jnp.tanh(c)
            seq_sc[t * B:(t + 1) * B, :] = h            # contiguous (t,b)-row slot
        hn_ref[l] = h                                   # final states written once
        cn_ref[l] = c

    # FC + sigmoid only on the last n_last timesteps (the only rows surviving
    # the final out[:, -5:] slice) -- one contiguous scratch slice.
    r0 = (T - n_last) * B
    h_last = seq_sc[r0:r0 + n_last * B, :]              # (n_last*B, H)
    if fc_on_vpu:
        # O == 1: dot product per row on VPU/XLU, no MXU weight-load/drain.
        logits = jnp.sum(h_last * fcw_ref[...], axis=-1, keepdims=True)
    else:
        logits = jnp.dot(h_last.astype(fcw_ref.dtype), fcw_ref[...],
                         preferred_element_type=jnp.float32)
    out_ref[...] = jax.nn.sigmoid(logits + fcb_ref[...])


# ---------------------------------------------------------------------------
# Full module forward (eval mode).
# ---------------------------------------------------------------------------
def sentiment_rnn_forward(params, x_tokens, hidden, *, matmul_dtype=jnp.float32):
    """Reproduces SentimentRNN.forward (eval mode).

    x_tokens: (B, T) int32
    hidden:   (h0, c0), each (n_layers, B, H)
    returns:  (out (B, min(5, T*O)), (hN, cN))

    matmul_dtype: keep jnp.float32 for exact PyTorch-like numerics; use
    jnp.bfloat16 on v6e/v7x when scaling up (f32 accumulation is kept).
    """
    B, T = x_tokens.shape
    h0_all, c0_all = hidden
    n_layers, _, H = h0_all.shape
    O = params["fc_w"].shape[0]
    n_last = min(-(-5 // O), T)        # ceil(5/O) timesteps survive out[:, -5:]

    # Embedding gather, directly (t, b)-row ordered and flat: one XLA gather.
    emb_flat = jnp.take(params["embedding"], x_tokens.T.reshape(-1),
                        axis=0).astype(jnp.float32)               # (T*B, E)

    # Pre-transpose LSTM weights (split W_ih / W_hh); pre-sum the two biases.
    w_ih_t, w_hh_t, biases = [], [], []
    for l in range(n_layers):
        lw = params["lstm"][l]
        w_ih_t.append(lw["w_ih"].T.astype(matmul_dtype))          # (D_l, 4H)
        w_hh_t.append(lw["w_hh"].T.astype(matmul_dtype))          # (H, 4H)
        biases.append((lw["b_ih"] + lw["b_hh"]).reshape(1, 4 * H)
                      .astype(jnp.float32))

    fc_on_vpu = (O == 1)
    if fc_on_vpu:
        fc_w_arg = params["fc_w"].astype(jnp.float32)             # (1, H) row
    else:
        fc_w_arg = params["fc_w"].T.astype(matmul_dtype)          # (H, O)
    fc_b = params["fc_b"].reshape(1, O).astype(jnp.float32)

    kernel = functools.partial(_sentiment_kernel,
                               n_layers=n_layers, T=T, B=B, H=H, O=O,
                               n_last=n_last, fc_on_vpu=fc_on_vpu)

    # No grid: a single invocation, all operands fully resident in VMEM
    # (a few KiB total -- fits every TPU generation by a huge margin).
    vmem_spec = pl.BlockSpec(memory_space=pltpu.MemorySpace.VMEM)
    num_inputs = 3 + 3 * n_layers + 2

    fc_out, hN, cN = pl.pallas_call(
        kernel,
        out_shape=(
            jax.ShapeDtypeStruct((n_last * B, O), jnp.float32),    # fc+sigmoid rows
            jax.ShapeDtypeStruct((n_layers, B, H), jnp.float32),   # hN
            jax.ShapeDtypeStruct((n_layers, B, H), jnp.float32),   # cN
        ),
        in_specs=[vmem_spec] * num_inputs,
        out_specs=(vmem_spec, vmem_spec, vmem_spec),
        scratch_shapes=[pltpu.VMEM((T * B, H), jnp.float32)],      # per-step hiddens
    )(emb_flat, h0_all, c0_all, *w_ih_t, *w_hh_t, *biases, fc_w_arg, fc_b)

    # Reassemble PyTorch's (B, T*O)[:, -5:] from the (t, b)-ordered fc rows.
    out = jnp.transpose(fc_out.reshape(n_last, B, O), (1, 0, 2)).reshape(B, n_last * O)
    out = out[:, -5:]
    return out, (hN, cN)


# ---------------------------------------------------------------------------
# Deterministic parameter init (PyTorch-style uniform(-1/sqrt(H), 1/sqrt(H))).
# ---------------------------------------------------------------------------
def init_params(key, corpus_size, output_size, embedd_dim, hidden_dim, n_layers):
    keys = jax.random.split(key, 3 + 4 * n_layers)
    k = iter(keys)
    bound = 1.0 / jnp.sqrt(hidden_dim)

    params = {
        "embedding": jax.random.normal(next(k), (corpus_size, embedd_dim),
                                       dtype=jnp.float32),
        "lstm": [],
        "fc_w": jax.random.uniform(next(k), (output_size, hidden_dim),
                                   minval=-bound, maxval=bound, dtype=jnp.float32),
        "fc_b": jax.random.uniform(next(k), (output_size,),
                                   minval=-bound, maxval=bound, dtype=jnp.float32),
    }
    for l in range(n_layers):
        in_dim = embedd_dim if l == 0 else hidden_dim
        params["lstm"].append({
            "w_ih": jax.random.uniform(next(k), (4 * hidden_dim, in_dim),
                                       minval=-bound, maxval=bound, dtype=jnp.float32),
            "w_hh": jax.random.uniform(next(k), (4 * hidden_dim, hidden_dim),
                                       minval=-bound, maxval=bound, dtype=jnp.float32),
            "b_ih": jax.random.uniform(next(k), (4 * hidden_dim,),
                                       minval=-bound, maxval=bound, dtype=jnp.float32),
            "b_hh": jax.random.uniform(next(k), (4 * hidden_dim,),
                                       minval=-bound, maxval=bound, dtype=jnp.float32),
        })
    return params


if __name__ == "__main__":
    corpus_size = 50
    output_size = 1
    embedd_dim = 32
    hidden_dim = 32
    n_layers = 2
    batch = 2
    seq = 8   # seq * output_size >= 5 so the final [:, -5:] slice is full width

    key = jax.random.PRNGKey(0)
    pkey, xkey = jax.random.split(key)

    params = init_params(pkey, corpus_size, output_size,
                         embedd_dim, hidden_dim, n_layers)

    x = jax.random.randint(xkey, (batch, seq), 0, corpus_size, dtype=jnp.int32)
    # init_hidden: zeros of shape (n_layers, batch, hidden_dim)
    h0 = jnp.zeros((n_layers, batch, hidden_dim), dtype=jnp.float32)
    c0 = jnp.zeros((n_layers, batch, hidden_dim), dtype=jnp.float32)

    fwd = jax.jit(sentiment_rnn_forward)
    out, (hN, cN) = fwd(params, x, (h0, c0))
    jax.block_until_ready(out)
    jax.block_until_ready(hN)
    jax.block_until_ready(cN)

    assert out.shape == (batch, 5), out.shape
    assert hN.shape == (n_layers, batch, hidden_dim)
    assert cN.shape == (n_layers, batch, hidden_dim)
    assert bool(jnp.all(jnp.isfinite(out)))
    print("KERNEL_OK")
</pallas_src>

<mosaic_0001>
module attributes {stable_mosaic.version = 11 : i64} {
  func.func @_sentiment_kernel(%arg0: memref<16x32xf32, #tpu.memory_space<vmem>>, %arg1: memref<2x2x32xf32, #tpu.memory_space<vmem>>, %arg2: memref<2x2x32xf32, #tpu.memory_space<vmem>>, %arg3: memref<32x128xf32, #tpu.memory_space<vmem>>, %arg4: memref<32x128xf32, #tpu.memory_space<vmem>>, %arg5: memref<32x128xf32, #tpu.memory_space<vmem>>, %arg6: memref<32x128xf32, #tpu.memory_space<vmem>>, %arg7: memref<1x128xf32, #tpu.memory_space<vmem>>, %arg8: memref<1x128xf32, #tpu.memory_space<vmem>>, %arg9: memref<1x32xf32, #tpu.memory_space<vmem>>, %arg10: memref<1x1xf32, #tpu.memory_space<vmem>>, %arg11: memref<10x1xf32, #tpu.memory_space<vmem>>, %arg12: memref<2x2x32xf32, #tpu.memory_space<vmem>>, %arg13: memref<2x2x32xf32, #tpu.memory_space<vmem>>, %arg14: memref<16x32xf32, #tpu.memory_space<vmem>>) attributes {dimension_semantics = [], scalar_prefetch = 0 : i64, scratch_operands = 1 : i64, tpu.core_type = #tpu.core_type<tc>} {
    %c0 = arith.constant 0 : index
    %c0_0 = arith.constant 0 : index
    %0 = vector.load %arg3[%c0, %c0_0] : memref<32x128xf32, #tpu.memory_space<vmem>>, vector<32x128xf32>
    %c0_1 = arith.constant 0 : index
    %c0_2 = arith.constant 0 : index
    %1 = vector.load %arg5[%c0_1, %c0_2] : memref<32x128xf32, #tpu.memory_space<vmem>>, vector<32x128xf32>
    %c0_3 = arith.constant 0 : index
    %c0_4 = arith.constant 0 : index
    %2 = vector.load %arg0[%c0_3, %c0_4] : memref<16x32xf32, #tpu.memory_space<vmem>>, vector<16x32xf32>
    %cst = arith.constant dense<0.000000e+00> : vector<16x128xf32>
    %3 = tpu.matmul %2, %0, %cst {dimension_numbers = #tpu.dot_dimension_numbers<[1], [0], [0], [1], [0, 0, 1, 1], [], []>} : vector<16x32xf32>, vector<32x128xf32>, vector<16x128xf32> -> vector<16x128xf32>
    %c0_5 = arith.constant 0 : index
    %c0_6 = arith.constant 0 : index
    %4 = vector.load %arg7[%c0_5, %c0_6] : memref<1x128xf32, #tpu.memory_space<vmem>>, vector<1x128xf32>
    %5 = vector.broadcast %4 : vector<1x128xf32> to vector<16x128xf32>
    %6 = arith.addf %3, %5 : vector<16x128xf32>
    %c0_7 = arith.constant 0 : index
    %c0_8 = arith.constant 0 : index
    %c0_9 = arith.constant 0 : index
    %7 = vector.load %arg1[%c0_7, %c0_8, %c0_9] : memref<2x2x32xf32, #tpu.memory_space<vmem>>, vector<1x2x32xf32>
    %8 = vector.shape_cast %7 : vector<1x2x32xf32> to vector<2x32xf32>
    %c0_10 = arith.constant 0 : index
    %c0_11 = arith.constant 0 : index
    %c0_12 = arith.constant 0 : index
    %9 = vector.load %arg2[%c0_10, %c0_11, %c0_12] : memref<2x2x32xf32, #tpu.memory_space<vmem>>, vector<1x2x32xf32>
    %10 = vector.shape_cast %9 : vector<1x2x32xf32> to vector<2x32xf32>
    %11 = vector.extract_strided_slice %6 {offsets = [0, 0], sizes = [2, 128], strides = [1, 1]} : vector<16x128xf32> to vector<2x128xf32>
    %cst_13 = arith.constant dense<0.000000e+00> : vector<2x128xf32>
    %12 = tpu.matmul %8, %1, %cst_13 {dimension_numbers = #tpu.dot_dimension_numbers<[1], [0], [0], [1], [0, 0, 1, 1], [], []>} : vector<2x32xf32>, vector<32x128xf32>, vector<2x128xf32> -> vector<2x128xf32>
    %13 = arith.addf %11, %12 : vector<2x128xf32>
    %14 = arith.negf %13 : vector<2x128xf32>
    %15 = math.exp %14 : vector<2x128xf32>
    %cst_14 = arith.constant 1.000000e+00 : f32
    %16 = vector.broadcast %cst_14 : f32 to vector<2x128xf32>
    %17 = arith.addf %16, %15 : vector<2x128xf32>
    %18 = arith.divf %16, %17 : vector<2x128xf32>
    %19 = math.tanh %13 : vector<2x128xf32>
    %20 = vector.extract_strided_slice %18 {offsets = [0, 0], sizes = [2, 32], strides = [1, 1]} : vector<2x128xf32> to vector<2x32xf32>
    %21 = vector.extract_strided_slice %18 {offsets = [0, 32], sizes = [2, 32], strides = [1, 1]} : vector<2x128xf32> to vector<2x32xf32>
    %22 = vector.extract_strided_slice %19 {offsets = [0, 64], sizes = [2, 32], strides = [1, 1]} : vector<2x128xf32> to vector<2x32xf32>
    %23 = vector.extract_strided_slice %18 {offsets = [0, 96], sizes = [2, 32], strides = [1, 1]} : vector<2x128xf32> to vector<2x32xf32>
    %24 = arith.mulf %21, %10 : vector<2x32xf32>
    %25 = arith.mulf %20, %22 : vector<2x32xf32>
    %26 = arith.addf %24, %25 : vector<2x32xf32>
    %27 = math.tanh %26 : vector<2x32xf32>
    %28 = arith.mulf %23, %27 : vector<2x32xf32>
    %c0_15 = arith.constant 0 : index
    %c0_16 = arith.constant 0 : index
    %29 = vector.load %arg14[%c0_15, %c0_16] : memref<16x32xf32, #tpu.memory_space<vmem>>, vector<2x32xf32>
    tpu.vector_store %arg14[%c0_15, %c0_16], %28 {strides = array<i32>} : memref<16x32xf32, #tpu.memory_space<vmem>>, vector<2x32xf32>,
    %30 = vector.extract_strided_slice %6 {offsets = [2, 0], sizes = [2, 128], strides = [1, 1]} : vector<16x128xf32> to vector<2x128xf32>
    %cst_17 = arith.constant dense<0.000000e+00> : vector<2x128xf32>
    %31 = tpu.matmul %28, %1, %cst_17 {dimension_numbers = #tpu.dot_dimension_numbers<[1], [0], [0], [1], [0, 0, 1, 1], [], []>} : vector<2x32xf32>, vector<32x128xf32>, vector<2x128xf32> -> vector<2x128xf32>
    %32 = arith.addf %30, %31 : vector<2x128xf32>
    %33 = arith.negf %32 : vector<2x128xf32>
    %34 = math.exp %33 : vector<2x128xf32>
    %cst_18 = arith.constant 1.000000e+00 : f32
    %35 = vector.broadcast %cst_18 : f32 to vector<2x128xf32>
    %36 = arith.addf %35, %34 : vector<2x128xf32>
    %37 = arith.divf %35, %36 : vector<2x128xf32>
    %38 = math.tanh %32 : vector<2x128xf32>
    %39 = vector.extract_strided_slice %37 {offsets = [0, 0], sizes = [2, 32], strides = [1, 1]} : vector<2x128xf32> to vector<2x32xf32>
    %40 = vector.extract_strided_slice %37 {offsets = [0, 32], sizes = [2, 32], strides = [1, 1]} : vector<2x128xf32> to vector<2x32xf32>
    %41 = vector.extract_strided_slice %38 {offsets = [0, 64], sizes = [2, 32], strides = [1, 1]} : vector<2x128xf32> to vector<2x32xf32>
    %42 = vector.extract_strided_slice %37 {offsets = [0, 96], sizes = [2, 32], strides = [1, 1]} : vector<2x128xf32> to vector<2x32xf32>
    %43 = arith.mulf %40, %26 : vector<2x32xf32>
    %44 = arith.mulf %39, %41 : vector<2x32xf32>
    %45 = arith.addf %43, %44 : vector<2x32xf32>
    %46 = math.tanh %45 : vector<2x32xf32>
    %47 = arith.mulf %42, %46 : vector<2x32xf32>
    %c2 = arith.constant 2 : index
    %c0_19 = arith.constant 0 : index
    %48 = vector.load %arg14[%c2, %c0_19] : memref<16x32xf32, #tpu.memory_space<vmem>>, vector<2x32xf32>
    tpu.vector_store %arg14[%c2, %c0_19], %47 {strides = array<i32>} : memref<16x32xf32, #tpu.memory_space<vmem>>, vector<2x32xf32>,
    %49 = vector.extract_strided_slice %6 {offsets = [4, 0], sizes = [2, 128], strides = [1, 1]} : vector<16x128xf32> to vector<2x128xf32>
    %cst_20 = arith.constant dense<0.000000e+00> : vector<2x128xf32>
    %50 = tpu.matmul %47, %1, %cst_20 {dimension_numbers = #tpu.dot_dimension_numbers<[1], [0], [0], [1], [0, 0, 1, 1], [], []>} : vector<2x32xf32>, vector<32x128xf32>, vector<2x128xf32> -> vector<2x128xf32>
    %51 = arith.addf %49, %50 : vector<2x128xf32>
    %52 = arith.negf %51 : vector<2x128xf32>
    %53 = math.exp %52 : vector<2x128xf32>
    %cst_21 = arith.constant 1.000000e+00 : f32
    %54 = vector.broadcast %cst_21 : f32 to vector<2x128xf32>
    %55 = arith.addf %54, %53 : vector<2x128xf32>
    %56 = arith.divf %54, %55 : vector<2x128xf32>
    %57 = math.tanh %51 : vector<2x128xf32>
    %58 = vector.extract_strided_slice %56 {offsets = [0, 0], sizes = [2, 32], strides = [1, 1]} : vector<2x128xf32> to vector<2x32xf32>
    %59 = vector.extract_strided_slice %56 {offsets = [0, 32], sizes = [2, 32], strides = [1, 1]} : vector<2x128xf32> to vector<2x32xf32>
    %60 = vector.extract_strided_slice %57 {offsets = [0, 64], sizes = [2, 32], strides = [1, 1]} : vector<2x128xf32> to vector<2x32xf32>
    %61 = vector.extract_strided_slice %56 {offsets = [0, 96], sizes = [2, 32], strides = [1, 1]} : vector<2x128xf32> to vector<2x32xf32>
    %62 = arith.mulf %59, %45 : vector<2x32xf32>
    %63 = arith.mulf %58, %60 : vector<2x32xf32>
    %64 = arith.addf %62, %63 : vector<2x32xf32>
    %65 = math.tanh %64 : vector<2x32xf32>
    %66 = arith.mulf %61, %65 : vector<2x32xf32>
    %c4 = arith.constant 4 : index
    %c0_22 = arith.constant 0 : index
    %67 = vector.load %arg14[%c4, %c0_22] : memref<16x32xf32, #tpu.memory_space<vmem>>, vector<2x32xf32>
    tpu.vector_store %arg14[%c4, %c0_22], %66 {strides = array<i32>} : memref<16x32xf32, #tpu.memory_space<vmem>>, vector<2x32xf32>,
    %68 = vector.extract_strided_slice %6 {offsets = [6, 0], sizes = [2, 128], strides = [1, 1]} : vector<16x128xf32> to vector<2x128xf32>
    %cst_23 = arith.constant dense<0.000000e+00> : vector<2x128xf32>
    %69 = tpu.matmul %66, %1, %cst_23 {dimension_numbers = #tpu.dot_dimension_numbers<[1], [0], [0], [1], [0, 0, 1, 1], [], []>} : vector<2x32xf32>, vector<32x128xf32>, vector<2x128xf32> -> vector<2x128xf32>
    %70 = arith.addf %68, %69 : vector<2x128xf32>
    %71 = arith.negf %70 : vector<2x128xf32>
    %72 = math.exp %71 : vector<2x128xf32>
    %cst_24 = arith.constant 1.000000e+00 : f32
    %73 = vector.broadcast %cst_24 : f32 to vector<2x128xf32>
    %74 = arith.addf %73, %72 : vector<2x128xf32>
    %75 = arith.divf %73, %74 : vector<2x128xf32>
    %76 = math.tanh %70 : vector<2x128xf32>
    %77 = vector.extract_strided_slice %75 {offsets = [0, 0], sizes = [2, 32], strides = [1, 1]} : vector<2x128xf32> to vector<2x32xf32>
    %78 = vector.extract_strided_slice %75 {offsets = [0, 32], sizes = [2, 32], strides = [1, 1]} : vector<2x128xf32> to vector<2x32xf32>
    %79 = vector.extract_strided_slice %76 {offsets = [0, 64], sizes = [2, 32], strides = [1, 1]} : vector<2x128xf32> to vector<2x32xf32>
    %80 = vector.extract_strided_slice %75 {offsets = [0, 96], sizes = [2, 32], strides = [1, 1]} : vector<2x128xf32> to vector<2x32xf32>
    %81 = arith.mulf %78, %64 : vector<2x32xf32>
    %82 = arith.mulf %77, %79 : vector<2x32xf32>
    %83 = arith.addf %81, %82 : vector<2x32xf32>
    %84 = math.tanh %83 : vector<2x32xf32>
    %85 = arith.mulf %80, %84 : vector<2x32xf32>
    %c6 = arith.constant 6 : index
    %c0_25 = arith.constant 0 : index
    %86 = vector.load %arg14[%c6, %c0_25] : memref<16x32xf32, #tpu.memory_space<vmem>>, vector<2x32xf32>
    tpu.vector_store %arg14[%c6, %c0_25], %85 {strides = array<i32>} : memref<16x32xf32, #tpu.memory_space<vmem>>, vector<2x32xf32>,
    %87 = vector.extract_strided_slice %6 {offsets = [8, 0], sizes = [2, 128], strides = [1, 1]} : vector<16x128xf32> to vector<2x128xf32>
    %cst_26 = arith.constant dense<0.000000e+00> : vector<2x128xf32>
    %88 = tpu.matmul %85, %1, %cst_26 {dimension_numbers = #tpu.dot_dimension_numbers<[1], [0], [0], [1], [0, 0, 1, 1], [], []>} : vector<2x32xf32>, vector<32x128xf32>, vector<2x128xf32> -> vector<2x128xf32>
    %89 = arith.addf %87, %88 : vector<2x128xf32>
    %90 = arith.negf %89 : vector<2x128xf32>
    %91 = math.exp %90 : vector<2x128xf32>
    %cst_27 = arith.constant 1.000000e+00 : f32
    %92 = vector.broadcast %cst_27 : f32 to vector<2x128xf32>
    %93 = arith.addf %92, %91 : vector<2x128xf32>
    %94 = arith.divf %92, %93 : vector<2x128xf32>
    %95 = math.tanh %89 : vector<2x128xf32>
    %96 = vector.extract_strided_slice %94 {offsets = [0, 0], sizes = [2, 32], strides = [1, 1]} : vector<2x128xf32> to vector<2x32xf32>
    %97 = vector.extract_strided_slice %94 {offsets = [0, 32], sizes = [2, 32], strides = [1, 1]} : vector<2x128xf32> to vector<2x32xf32>
    %98 = vector.extract_strided_slice %95 {offsets = [0, 64], sizes = [2, 32], strides = [1, 1]} : vector<2x128xf32> to vector<2x32xf32>
    %99 = vector.extract_strided_slice %94 {offsets = [0, 96], sizes = [2, 32], strides = [1, 1]} : vector<2x128xf32> to vector<2x32xf32>
    %100 = arith.mulf %97, %83 : vector<2x32xf32>
    %101 = arith.mulf %96, %98 : vector<2x32xf32>
    %102 = arith.addf %100, %101 : vector<2x32xf32>
    %103 = math.tanh %102 : vector<2x32xf32>
    %104 = arith.mulf %99, %103 : vector<2x32xf32>
    %c8 = arith.constant 8 : index
    %c0_28 = arith.constant 0 : index
    %105 = vector.load %arg14[%c8, %c0_28] : memref<16x32xf32, #tpu.memory_space<vmem>>, vector<2x32xf32>
    tpu.vector_store %arg14[%c8, %c0_28], %104 {strides = array<i32>} : memref<16x32xf32, #tpu.memory_space<vmem>>, vector<2x32xf32>,
    %106 = vector.extract_strided_slice %6 {offsets = [10, 0], sizes = [2, 128], strides = [1, 1]} : vector<16x128xf32> to vector<2x128xf32>
    %cst_29 = arith.constant dense<0.000000e+00> : vector<2x128xf32>
    %107 = tpu.matmul %104, %1, %cst_29 {dimension_numbers = #tpu.dot_dimension_numbers<[1], [0], [0], [1], [0, 0, 1, 1], [], []>} : vector<2x32xf32>, vector<32x128xf32>, vector<2x128xf32> -> vector<2x128xf32>
    %108 = arith.addf %106, %107 : vector<2x128xf32>
    %109 = arith.negf %108 : vector<2x128xf32>
    %110 = math.exp %109 : vector<2x128xf32>
    %cst_30 = arith.constant 1.000000e+00 : f32
    %111 = vector.broadcast %cst_30 : f32 to vector<2x128xf32>
    %112 = arith.addf %111, %110 : vector<2x128xf32>
    %113 = arith.divf %111, %112 : vector<2x128xf32>
    %114 = math.tanh %108 : vector<2x128xf32>
    %115 = vector.extract_strided_slice %113 {offsets = [0, 0], sizes = [2, 32], strides = [1, 1]} : vector<2x128xf32> to vector<2x32xf32>
    %116 = vector.extract_strided_slice %113 {offsets = [0, 32], sizes = [2, 32], strides = [1, 1]} : vector<2x128xf32> to vector<2x32xf32>
    %117 = vector.extract_strided_slice %114 {offsets = [0, 64], sizes = [2, 32], strides = [1, 1]} : vector<2x128xf32> to vector<2x32xf32>
    %118 = vector.extract_strided_slice %113 {offsets = [0, 96], sizes = [2, 32], strides = [1, 1]} : vector<2x128xf32> to vector<2x32xf32>
    %119 = arith.mulf %116, %102 : vector<2x32xf32>
    %120 = arith.mulf %115, %117 : vector<2x32xf32>
    %121 = arith.addf %119, %120 : vector<2x32xf32>
    %122 = math.tanh %121 : vector<2x32xf32>
    %123 = arith.mulf %118, %122 : vector<2x32xf32>
    %c10 = arith.constant 10 : index
    %c0_31 = arith.constant 0 : index
    %124 = vector.load %arg14[%c10, %c0_31] : memref<16x32xf32, #tpu.memory_space<vmem>>, vector<2x32xf32>
    tpu.vector_store %arg14[%c10, %c0_31], %123 {strides = array<i32>} : memref<16x32xf32, #tpu.memory_space<vmem>>, vector<2x32xf32>,
    %125 = vector.extract_strided_slice %6 {offsets = [12, 0], sizes = [2, 128], strides = [1, 1]} : vector<16x128xf32> to vector<2x128xf32>
    %cst_32 = arith.constant dense<0.000000e+00> : vector<2x128xf32>
    %126 = tpu.matmul %123, %1, %cst_32 {dimension_numbers = #tpu.dot_dimension_numbers<[1], [0], [0], [1], [0, 0, 1, 1], [], []>} : vector<2x32xf32>, vector<32x128xf32>, vector<2x128xf32> -> vector<2x128xf32>
    %127 = arith.addf %125, %126 : vector<2x128xf32>
    %128 = arith.negf %127 : vector<2x128xf32>
    %129 = math.exp %128 : vector<2x128xf32>
    %cst_33 = arith.constant 1.000000e+00 : f32
    %130 = vector.broadcast %cst_33 : f32 to vector<2x128xf32>
    %131 = arith.addf %130, %129 : vector<2x128xf32>
    %132 = arith.divf %130, %131 : vector<2x128xf32>
    %133 = math.tanh %127 : vector<2x128xf32>
    %134 = vector.extract_strided_slice %132 {offsets = [0, 0], sizes = [2, 32], strides = [1, 1]} : vector<2x128xf32> to vector<2x32xf32>
    %135 = vector.extract_strided_slice %132 {offsets = [0, 32], sizes = [2, 32], strides = [1, 1]} : vector<2x128xf32> to vector<2x32xf32>
    %136 = vector.extract_strided_slice %133 {offsets = [0, 64], sizes = [2, 32], strides = [1, 1]} : vector<2x128xf32> to vector<2x32xf32>
    %137 = vector.extract_strided_slice %132 {offsets = [0, 96], sizes = [2, 32], strides = [1, 1]} : vector<2x128xf32> to vector<2x32xf32>
    %138 = arith.mulf %135, %121 : vector<2x32xf32>
    %139 = arith.mulf %134, %136 : vector<2x32xf32>
    %140 = arith.addf %138, %139 : vector<2x32xf32>
    %141 = math.tanh %140 : vector<2x32xf32>
    %142 = arith.mulf %137, %141 : vector<2x32xf32>
    %c12 = arith.constant 12 : index
    %c0_34 = arith.constant 0 : index
    %143 = vector.load %arg14[%c12, %c0_34] : memref<16x32xf32, #tpu.memory_space<vmem>>, vector<2x32xf32>
    tpu.vector_store %arg14[%c12, %c0_34], %142 {strides = array<i32>} : memref<16x32xf32, #tpu.memory_space<vmem>>, vector<2x32xf32>,
    %144 = vector.extract_strided_slice %6 {offsets = [14, 0], sizes = [2, 128], strides = [1, 1]} : vector<16x128xf32> to vector<2x128xf32>
    %cst_35 = arith.constant dense<0.000000e+00> : vector<2x128xf32>
    %145 = tpu.matmul %142, %1, %cst_35 {dimension_numbers = #tpu.dot_dimension_numbers<[1], [0], [0], [1], [0, 0, 1, 1], [], []>} : vector<2x32xf32>, vector<32x128xf32>, vector<2x128xf32> -> vector<2x128xf32>
    %146 = arith.addf %144, %145 : vector<2x128xf32>
    %147 = arith.negf %146 : vector<2x128xf32>
    %148 = math.exp %147 : vector<2x128xf32>
    %cst_36 = arith.constant 1.000000e+00 : f32
    %149 = vector.broadcast %cst_36 : f32 to vector<2x128xf32>
    %150 = arith.addf %149, %148 : vector<2x128xf32>
    %151 = arith.divf %149, %150 : vector<2x128xf32>
    %152 = math.tanh %146 : vector<2x128xf32>
    %153 = vector.extract_strided_slice %151 {offsets = [0, 0], sizes = [2, 32], strides = [1, 1]} : vector<2x128xf32> to vector<2x32xf32>
    %154 = vector.extract_strided_slice %151 {offsets = [0, 32], sizes = [2, 32], strides = [1, 1]} : vector<2x128xf32> to vector<2x32xf32>
    %155 = vector.extract_strided_slice %152 {offsets = [0, 64], sizes = [2, 32], strides = [1, 1]} : vector<2x128xf32> to vector<2x32xf32>
    %156 = vector.extract_strided_slice %151 {offsets = [0, 96], sizes = [2, 32], strides = [1, 1]} : vector<2x128xf32> to vector<2x32xf32>
    %157 = arith.mulf %154, %140 : vector<2x32xf32>
    %158 = arith.mulf %153, %155 : vector<2x32xf32>
    %159 = arith.addf %157, %158 : vector<2x32xf32>
    %160 = math.tanh %159 : vector<2x32xf32>
    %161 = arith.mulf %156, %160 : vector<2x32xf32>
    %c14 = arith.constant 14 : index
    %c0_37 = arith.constant 0 : index
    %162 = vector.load %arg14[%c14, %c0_37] : memref<16x32xf32, #tpu.memory_space<vmem>>, vector<2x32xf32>
    tpu.vector_store %arg14[%c14, %c0_37], %161 {strides = array<i32>} : memref<16x32xf32, #tpu.memory_space<vmem>>, vector<2x32xf32>,
    %c0_38 = arith.constant 0 : index
    %c0_39 = arith.constant 0 : index
    %c0_40 = arith.constant 0 : index
    %163 = vector.load %arg12[%c0_38, %c0_39, %c0_40] : memref<2x2x32xf32, #tpu.memory_space<vmem>>, vector<1x2x32xf32>
    %164 = vector.shape_cast %163 : vector<1x2x32xf32> to vector<2x32xf32>
    %165 = vector.shape_cast %161 : vector<2x32xf32> to vector<1x2x32xf32>
    tpu.vector_store %arg12[%c0_38, %c0_39, %c0_40], %165 {strides = array<i32>} : memref<2x2x32xf32, #tpu.memory_space<vmem>>, vector<1x2x32xf32>,
    %c0_41 = arith.constant 0 : index
    %c0_42 = arith.constant 0 : index
    %c0_43 = arith.constant 0 : index
    %166 = vector.load %arg13[%c0_41, %c0_42, %c0_43] : memref<2x2x32xf32, #tpu.memory_space<vmem>>, vector<1x2x32xf32>
    %167 = vector.shape_cast %166 : vector<1x2x32xf32> to vector<2x32xf32>
    %168 = vector.shape_cast %159 : vector<2x32xf32> to vector<1x2x32xf32>
    tpu.vector_store %arg13[%c0_41, %c0_42, %c0_43], %168 {strides = array<i32>} : memref<2x2x32xf32, #tpu.memory_space<vmem>>, vector<1x2x32xf32>,
    %c0_44 = arith.constant 0 : index
    %c0_45 = arith.constant 0 : index
    %169 = vector.load %arg4[%c0_44, %c0_45] : memref<32x128xf32, #tpu.memory_space<vmem>>, vector<32x128xf32>
    %c0_46 = arith.constant 0 : index
    %c0_47 = arith.constant 0 : index
    %170 = vector.load %arg6[%c0_46, %c0_47] : memref<32x128xf32, #tpu.memory_space<vmem>>, vector<32x128xf32>
    %c0_48 = arith.constant 0 : index
    %c0_49 = arith.constant 0 : index
    %171 = vector.load %arg14[%c0_48, %c0_49] : memref<16x32xf32, #tpu.memory_space<vmem>>, vector<16x32xf32>
    %cst_50 = arith.constant dense<0.000000e+00> : vector<16x128xf32>
    %172 = tpu.matmul %171, %169, %cst_50 {dimension_numbers = #tpu.dot_dimension_numbers<[1], [0], [0], [1], [0, 0, 1, 1], [], []>} : vector<16x32xf32>, vector<32x128xf32>, vector<16x128xf32> -> vector<16x128xf32>
    %c0_51 = arith.constant 0 : index
    %c0_52 = arith.constant 0 : index
    %173 = vector.load %arg8[%c0_51, %c0_52] : memref<1x128xf32, #tpu.memory_space<vmem>>, vector<1x128xf32>
    %174 = vector.broadcast %173 : vector<1x128xf32> to vector<16x128xf32>
    %175 = arith.addf %172, %174 : vector<16x128xf32>
    %c1 = arith.constant 1 : index
    %c0_53 = arith.constant 0 : index
    %c0_54 = arith.constant 0 : index
    %176 = vector.load %arg1[%c1, %c0_53, %c0_54] : memref<2x2x32xf32, #tpu.memory_space<vmem>>, vector<1x2x32xf32>
    %177 = vector.shape_cast %176 : vector<1x2x32xf32> to vector<2x32xf32>
    %c1_55 = arith.constant 1 : index
    %c0_56 = arith.constant 0 : index
    %c0_57 = arith.constant 0 : index
    %178 = vector.load %arg2[%c1_55, %c0_56, %c0_57] : memref<2x2x32xf32, #tpu.memory_space<vmem>>, vector<1x2x32xf32>
    %179 = vector.shape_cast %178 : vector<1x2x32xf32> to vector<2x32xf32>
    %180 = vector.extract_strided_slice %175 {offsets = [0, 0], sizes = [2, 128], strides = [1, 1]} : vector<16x128xf32> to vector<2x128xf32>
    %cst_58 = arith.constant dense<0.000000e+00> : vector<2x128xf32>
    %181 = tpu.matmul %177, %170, %cst_58 {dimension_numbers = #tpu.dot_dimension_numbers<[1], [0], [0], [1], [0, 0, 1, 1], [], []>} : vector<2x32xf32>, vector<32x128xf32>, vector<2x128xf32> -> vector<2x128xf32>
    %182 = arith.addf %180, %181 : vector<2x128xf32>
    %183 = arith.negf %182 : vector<2x128xf32>
    %184 = math.exp %183 : vector<2x128xf32>
    %cst_59 = arith.constant 1.000000e+00 : f32
    %185 = vector.broadcast %cst_59 : f32 to vector<2x128xf32>
    %186 = arith.addf %185, %184 : vector<2x128xf32>
    %187 = arith.divf %185, %186 : vector<2x128xf32>
    %188 = math.tanh %182 : vector<2x128xf32>
    %189 = vector.extract_strided_slice %187 {offsets = [0, 0], sizes = [2, 32], strides = [1, 1]} : vector<2x128xf32> to vector<2x32xf32>
    %190 = vector.extract_strided_slice %187 {offsets = [0, 32], sizes = [2, 32], strides = [1, 1]} : vector<2x128xf32> to vector<2x32xf32>
    %191 = vector.extract_strided_slice %188 {offsets = [0, 64], sizes = [2, 32], strides = [1, 1]} : vector<2x128xf32> to vector<2x32xf32>
    %192 = vector.extract_strided_slice %187 {offsets = [0, 96], sizes = [2, 32], strides = [1, 1]} : vector<2x128xf32> to vector<2x32xf32>
    %193 = arith.mulf %190, %179 : vector<2x32xf32>
    %194 = arith.mulf %189, %191 : vector<2x32xf32>
    %195 = arith.addf %193, %194 : vector<2x32xf32>
    %196 = math.tanh %195 : vector<2x32xf32>
    %197 = arith.mulf %192, %196 : vector<2x32xf32>
    %c0_60 = arith.constant 0 : index
    %c0_61 = arith.constant 0 : index
    %198 = vector.load %arg14[%c0_60, %c0_61] : memref<16x32xf32, #tpu.memory_space<vmem>>, vector<2x32xf32>
    tpu.vector_store %arg14[%c0_60, %c0_61], %197 {strides = array<i32>} : memref<16x32xf32, #tpu.memory_space<vmem>>, vector<2x32xf32>,
    %199 = vector.extract_strided_slice %175 {offsets = [2, 0], sizes = [2, 128], strides = [1, 1]} : vector<16x128xf32> to vector<2x128xf32>
    %cst_62 = arith.constant dense<0.000000e+00> : vector<2x128xf32>
    %200 = tpu.matmul %197, %170, %cst_62 {dimension_numbers = #tpu.dot_dimension_numbers<[1], [0], [0], [1], [0, 0, 1, 1], [], []>} : vector<2x32xf32>, vector<32x128xf32>, vector<2x128xf32> -> vector<2x128xf32>
    %201 = arith.addf %199, %200 : vector<2x128xf32>
    %202 = arith.negf %201 : vector<2x128xf32>
    %203 = math.exp %202 : vector<2x128xf32>
    %cst_63 = arith.constant 1.000000e+00 : f32
    %204 = vector.broadcast %cst_63 : f32 to vector<2x128xf32>
    %205 = arith.addf %204, %203 : vector<2x128xf32>
    %206 = arith.divf %204, %205 : vector<2x128xf32>
    %207 = math.tanh %201 : vector<2x128xf32>
    %208 = vector.extract_strided_slice %206 {offsets = [0, 0], sizes = [2, 32], strides = [1, 1]} : vector<2x128xf32> to vector<2x32xf32>
    %209 = vector.extract_strided_slice %206 {offsets = [0, 32], sizes = [2, 32], strides = [1, 1]} : vector<2x128xf32> to vector<2x32xf32>
    %210 = vector.extract_strided_slice %207 {offsets = [0, 64], sizes = [2, 32], strides = [1, 1]} : vector<2x128xf32> to vector<2x32xf32>
    %211 = vector.extract_strided_slice %206 {offsets = [0, 96], sizes = [2, 32], strides = [1, 1]} : vector<2x128xf32> to vector<2x32xf32>
    %212 = arith.mulf %209, %195 : vector<2x32xf32>
    %213 = arith.mulf %208, %210 : vector<2x32xf32>
    %214 = arith.addf %212, %213 : vector<2x32xf32>
    %215 = math.tanh %214 : vector<2x32xf32>
    %216 = arith.mulf %211, %215 : vector<2x32xf32>
    %c2_64 = arith.constant 2 : index
    %c0_65 = arith.constant 0 : index
    %217 = vector.load %arg14[%c2_64, %c0_65] : memref<16x32xf32, #tpu.memory_space<vmem>>, vector<2x32xf32>
    tpu.vector_store %arg14[%c2_64, %c0_65], %216 {strides = array<i32>} : memref<16x32xf32, #tpu.memory_space<vmem>>, vector<2x32xf32>,
    %218 = vector.extract_strided_slice %175 {offsets = [4, 0], sizes = [2, 128], strides = [1, 1]} : vector<16x128xf32> to vector<2x128xf32>
    %cst_66 = arith.constant dense<0.000000e+00> : vector<2x128xf32>
    %219 = tpu.matmul %216, %170, %cst_66 {dimension_numbers = #tpu.dot_dimension_numbers<[1], [0], [0], [1], [0, 0, 1, 1], [], []>} : vector<2x32xf32>, vector<32x128xf32>, vector<2x128xf32> -> vector<2x128xf32>
    %220 = arith.addf %218, %219 : vector<2x128xf32>
    %221 = arith.negf %220 : vector<2x128xf32>
    %222 = math.exp %221 : vector<2x128xf32>
    %cst_67 = arith.constant 1.000000e+00 : f32
    %223 = vector.broadcast %cst_67 : f32 to vector<2x128xf32>
    %224 = arith.addf %223, %222 : vector<2x128xf32>
    %225 = arith.divf %223, %224 : vector<2x128xf32>
    %226 = math.tanh %220 : vector<2x128xf32>
    %227 = vector.extract_strided_slice %225 {offsets = [0, 0], sizes = [2, 32], strides = [1, 1]} : vector<2x128xf32> to vector<2x32xf32>
    %228 = vector.extract_strided_slice %225 {offsets = [0, 32], sizes = [2, 32], strides = [1, 1]} : vector<2x128xf32> to vector<2x32xf32>
    %229 = vector.extract_strided_slice %226 {offsets = [0, 64], sizes = [2, 32], strides = [1, 1]} : vector<2x128xf32> to vector<2x32xf32>
    %230 = vector.extract_strided_slice %225 {offsets = [0, 96], sizes = [2, 32], strides = [1, 1]} : vector<2x128xf32> to vector<2x32xf32>
    %231 = arith.mulf %228, %214 : vector<2x32xf32>
    %232 = arith.mulf %227, %229 : vector<2x32xf32>
    %233 = arith.addf %231, %232 : vector<2x32xf32>
    %234 = math.tanh %233 : vector<2x32xf32>
    %235 = arith.mulf %230, %234 : vector<2x32xf32>
    %c4_68 = arith.constant 4 : index
    %c0_69 = arith.constant 0 : index
    %236 = vector.load %arg14[%c4_68, %c0_69] : memref<16x32xf32, #tpu.memory_space<vmem>>, vector<2x32xf32>
    tpu.vector_store %arg14[%c4_68, %c0_69], %235 {strides = array<i32>} : memref<16x32xf32, #tpu.memory_space<vmem>>, vector<2x32xf32>,
    %237 = vector.extract_strided_slice %175 {offsets = [6, 0], sizes = [2, 128], strides = [1, 1]} : vector<16x128xf32> to vector<2x128xf32>
    %cst_70 = arith.constant dense<0.000000e+00> : vector<2x128xf32>
    %238 = tpu.matmul %235, %170, %cst_70 {dimension_numbers = #tpu.dot_dimension_numbers<[1], [0], [0], [1], [0, 0, 1, 1], [], []>} : vector<2x32xf32>, vector<32x128xf32>, vector<2x128xf32> -> vector<2x128xf32>
    %239 = arith.addf %237, %238 : vector<2x128xf32>
    %240 = arith.negf %239 : vector<2x128xf32>
    %241 = math.exp %240 : vector<2x128xf32>
    %cst_71 = arith.constant 1.000000e+00 : f32
    %242 = vector.broadcast %cst_71 : f32 to vector<2x128xf32>
    %243 = arith.addf %242, %241 : vector<2x128xf32>
    %244 = arith.divf %242, %243 : vector<2x128xf32>
    %245 = math.tanh %239 : vector<2x128xf32>
    %246 = vector.extract_strided_slice %244 {offsets = [0, 0], sizes = [2, 32], strides = [1, 1]} : vector<2x128xf32> to vector<2x32xf32>
    %247 = vector.extract_strided_slice %244 {offsets = [0, 32], sizes = [2, 32], strides = [1, 1]} : vector<2x128xf32> to vector<2x32xf32>
    %248 = vector.extract_strided_slice %245 {offsets = [0, 64], sizes = [2, 32], strides = [1, 1]} : vector<2x128xf32> to vector<2x32xf32>
    %249 = vector.extract_strided_slice %244 {offsets = [0, 96], sizes = [2, 32], strides = [1, 1]} : vector<2x128xf32> to vector<2x32xf32>
    %250 = arith.mulf %247, %233 : vector<2x32xf32>
    %251 = arith.mulf %246, %248 : vector<2x32xf32>
    %252 = arith.addf %250, %251 : vector<2x32xf32>
    %253 = math.tanh %252 : vector<2x32xf32>
    %254 = arith.mulf %249, %253 : vector<2x32xf32>
    %c6_72 = arith.constant 6 : index
    %c0_73 = arith.constant 0 : index
    %255 = vector.load %arg14[%c6_72, %c0_73] : memref<16x32xf32, #tpu.memory_space<vmem>>, vector<2x32xf32>
    tpu.vector_store %arg14[%c6_72, %c0_73], %254 {strides = array<i32>} : memref<16x32xf32, #tpu.memory_space<vmem>>, vector<2x32xf32>,
    %256 = vector.extract_strided_slice %175 {offsets = [8, 0], sizes = [2, 128], strides = [1, 1]} : vector<16x128xf32> to vector<2x128xf32>
    %cst_74 = arith.constant dense<0.000000e+00> : vector<2x128xf32>
    %257 = tpu.matmul %254, %170, %cst_74 {dimension_numbers = #tpu.dot_dimension_numbers<[1], [0], [0], [1], [0, 0, 1, 1], [], []>} : vector<2x32xf32>, vector<32x128xf32>, vector<2x128xf32> -> vector<2x128xf32>
    %258 = arith.addf %256, %257 : vector<2x128xf32>
    %259 = arith.negf %258 : vector<2x128xf32>
    %260 = math.exp %259 : vector<2x128xf32>
    %cst_75 = arith.constant 1.000000e+00 : f32
    %261 = vector.broadcast %cst_75 : f32 to vector<2x128xf32>
    %262 = arith.addf %261, %260 : vector<2x128xf32>
    %263 = arith.divf %261, %262 : vector<2x128xf32>
    %264 = math.tanh %258 : vector<2x128xf32>
    %265 = vector.extract_strided_slice %263 {offsets = [0, 0], sizes = [2, 32], strides = [1, 1]} : vector<2x128xf32> to vector<2x32xf32>
    %266 = vector.extract_strided_slice %263 {offsets = [0, 32], sizes = [2, 32], strides = [1, 1]} : vector<2x128xf32> to vector<2x32xf32>
    %267 = vector.extract_strided_slice %264 {offsets = [0, 64], sizes = [2, 32], strides = [1, 1]} : vector<2x128xf32> to vector<2x32xf32>
    %268 = vector.extract_strided_slice %263 {offsets = [0, 96], sizes = [2, 32], strides = [1, 1]} : vector<2x128xf32> to vector<2x32xf32>
    %269 = arith.mulf %266, %252 : vector<2x32xf32>
    %270 = arith.mulf %265, %267 : vector<2x32xf32>
    %271 = arith.addf %269, %270 : vector<2x32xf32>
    %272 = math.tanh %271 : vector<2x32xf32>
    %273 = arith.mulf %268, %272 : vector<2x32xf32>
    %c8_76 = arith.constant 8 : index
    %c0_77 = arith.constant 0 : index
    %274 = vector.load %arg14[%c8_76, %c0_77] : memref<16x32xf32, #tpu.memory_space<vmem>>, vector<2x32xf32>
    tpu.vector_store %arg14[%c8_76, %c0_77], %273 {strides = array<i32>} : memref<16x32xf32, #tpu.memory_space<vmem>>, vector<2x32xf32>,
    %275 = vector.extract_strided_slice %175 {offsets = [10, 0], sizes = [2, 128], strides = [1, 1]} : vector<16x128xf32> to vector<2x128xf32>
    %cst_78 = arith.constant dense<0.000000e+00> : vector<2x128xf32>
    %276 = tpu.matmul %273, %170, %cst_78 {dimension_numbers = #tpu.dot_dimension_numbers<[1], [0], [0], [1], [0, 0, 1, 1], [], []>} : vector<2x32xf32>, vector<32x128xf32>, vector<2x128xf32> -> vector<2x128xf32>
    %277 = arith.addf %275, %276 : vector<2x128xf32>
    %278 = arith.negf %277 : vector<2x128xf32>
    %279 = math.exp %278 : vector<2x128xf32>
    %cst_79 = arith.constant 1.000000e+00 : f32
    %280 = vector.broadcast %cst_79 : f32 to vector<2x128xf32>
    %281 = arith.addf %280, %279 : vector<2x128xf32>
    %282 = arith.divf %280, %281 : vector<2x128xf32>
    %283 = math.tanh %277 : vector<2x128xf32>
    %284 = vector.extract_strided_slice %282 {offsets = [0, 0], sizes = [2, 32], strides = [1, 1]} : vector<2x128xf32> to vector<2x32xf32>
    %285 = vector.extract_strided_slice %282 {offsets = [0, 32], sizes = [2, 32], strides = [1, 1]} : vector<2x128xf32> to vector<2x32xf32>
    %286 = vector.extract_strided_slice %283 {offsets = [0, 64], sizes = [2, 32], strides = [1, 1]} : vector<2x128xf32> to vector<2x32xf32>
    %287 = vector.extract_strided_slice %282 {offsets = [0, 96], sizes = [2, 32], strides = [1, 1]} : vector<2x128xf32> to vector<2x32xf32>
    %288 = arith.mulf %285, %271 : vector<2x32xf32>
    %289 = arith.mulf %284, %286 : vector<2x32xf32>
    %290 = arith.addf %288, %289 : vector<2x32xf32>
    %291 = math.tanh %290 : vector<2x32xf32>
    %292 = arith.mulf %287, %291 : vector<2x32xf32>
    %c10_80 = arith.constant 10 : index
    %c0_81 = arith.constant 0 : index
    %293 = vector.load %arg14[%c10_80, %c0_81] : memref<16x32xf32, #tpu.memory_space<vmem>>, vector<2x32xf32>
    tpu.vector_store %arg14[%c10_80, %c0_81], %292 {strides = array<i32>} : memref<16x32xf32, #tpu.memory_space<vmem>>, vector<2x32xf32>,
    %294 = vector.extract_strided_slice %175 {offsets = [12, 0], sizes = [2, 128], strides = [1, 1]} : vector<16x128xf32> to vector<2x128xf32>
    %cst_82 = arith.constant dense<0.000000e+00> : vector<2x128xf32>
    %295 = tpu.matmul %292, %170, %cst_82 {dimension_numbers = #tpu.dot_dimension_numbers<[1], [0], [0], [1], [0, 0, 1, 1], [], []>} : vector<2x32xf32>, vector<32x128xf32>, vector<2x128xf32> -> vector<2x128xf32>
    %296 = arith.addf %294, %295 : vector<2x128xf32>
    %297 = arith.negf %296 : vector<2x128xf32>
    %298 = math.exp %297 : vector<2x128xf32>
    %cst_83 = arith.constant 1.000000e+00 : f32
    %299 = vector.broadcast %cst_83 : f32 to vector<2x128xf32>
    %300 = arith.addf %299, %298 : vector<2x128xf32>
    %301 = arith.divf %299, %300 : vector<2x128xf32>
    %302 = math.tanh %296 : vector<2x128xf32>
    %303 = vector.extract_strided_slice %301 {offsets = [0, 0], sizes = [2, 32], strides = [1, 1]} : vector<2x128xf32> to vector<2x32xf32>
    %304 = vector.extract_strided_slice %301 {offsets = [0, 32], sizes = [2, 32], strides = [1, 1]} : vector<2x128xf32> to vector<2x32xf32>
    %305 = vector.extract_strided_slice %302 {offsets = [0, 64], sizes = [2, 32], strides = [1, 1]} : vector<2x128xf32> to vector<2x32xf32>
    %306 = vector.extract_strided_slice %301 {offsets = [0, 96], sizes = [2, 32], strides = [1, 1]} : vector<2x128xf32> to vector<2x32xf32>
    %307 = arith.mulf %304, %290 : vector<2x32xf32>
    %308 = arith.mulf %303, %305 : vector<2x32xf32>
    %309 = arith.addf %307, %308 : vector<2x32xf32>
    %310 = math.tanh %309 : vector<2x32xf32>
    %311 = arith.mulf %306, %310 : vector<2x32xf32>
    %c12_84 = arith.constant 12 : index
    %c0_85 = arith.constant 0 : index
    %312 = vector.load %arg14[%c12_84, %c0_85] : memref<16x32xf32, #tpu.memory_space<vmem>>, vector<2x32xf32>
    tpu.vector_store %arg14[%c12_84, %c0_85], %311 {strides = array<i32>} : memref<16x32xf32, #tpu.memory_space<vmem>>, vector<2x32xf32>,
    %313 = vector.extract_strided_slice %175 {offsets = [14, 0], sizes = [2, 128], strides = [1, 1]} : vector<16x128xf32> to vector<2x128xf32>
    %cst_86 = arith.constant dense<0.000000e+00> : vector<2x128xf32>
    %314 = tpu.matmul %311, %170, %cst_86 {dimension_numbers = #tpu.dot_dimension_numbers<[1], [0], [0], [1], [0, 0, 1, 1], [], []>} : vector<2x32xf32>, vector<32x128xf32>, vector<2x128xf32> -> vector<2x128xf32>
    %315 = arith.addf %313, %314 : vector<2x128xf32>
    %316 = arith.negf %315 : vector<2x128xf32>
    %317 = math.exp %316 : vector<2x128xf32>
    %cst_87 = arith.constant 1.000000e+00 : f32
    %318 = vector.broadcast %cst_87 : f32 to vector<2x128xf32>
    %319 = arith.addf %318, %317 : vector<2x128xf32>
    %320 = arith.divf %318, %319 : vector<2x128xf32>
    %321 = math.tanh %315 : vector<2x128xf32>
    %322 = vector.extract_strided_slice %320 {offsets = [0, 0], sizes = [2, 32], strides = [1, 1]} : vector<2x128xf32> to vector<2x32xf32>
    %323 = vector.extract_strided_slice %320 {offsets = [0, 32], sizes = [2, 32], strides = [1, 1]} : vector<2x128xf32> to vector<2x32xf32>
    %324 = vector.extract_strided_slice %321 {offsets = [0, 64], sizes = [2, 32], strides = [1, 1]} : vector<2x128xf32> to vector<2x32xf32>
    %325 = vector.extract_strided_slice %320 {offsets = [0, 96], sizes = [2, 32], strides = [1, 1]} : vector<2x128xf32> to vector<2x32xf32>
    %326 = arith.mulf %323, %309 : vector<2x32xf32>
    %327 = arith.mulf %322, %324 : vector<2x32xf32>
    %328 = arith.addf %326, %327 : vector<2x32xf32>
    %329 = math.tanh %328 : vector<2x32xf32>
    %330 = arith.mulf %325, %329 : vector<2x32xf32>
    %c14_88 = arith.constant 14 : index
    %c0_89 = arith.constant 0 : index
    %331 = vector.load %arg14[%c14_88, %c0_89] : memref<16x32xf32, #tpu.memory_space<vmem>>, vector<2x32xf32>
    tpu.vector_store %arg14[%c14_88, %c0_89], %330 {strides = array<i32>} : memref<16x32xf32, #tpu.memory_space<vmem>>, vector<2x32xf32>,
    %c1_90 = arith.constant 1 : index
    %c0_91 = arith.constant 0 : index
    %c0_92 = arith.constant 0 : index
    %332 = vector.load %arg12[%c1_90, %c0_91, %c0_92] : memref<2x2x32xf32, #tpu.memory_space<vmem>>, vector<1x2x32xf32>
    %333 = vector.shape_cast %332 : vector<1x2x32xf32> to vector<2x32xf32>
    %334 = vector.shape_cast %330 : vector<2x32xf32> to vector<1x2x32xf32>
    tpu.vector_store %arg12[%c1_90, %c0_91, %c0_92], %334 {strides = array<i32>} : memref<2x2x32xf32, #tpu.memory_space<vmem>>, vector<1x2x32xf32>,
    %c1_93 = arith.constant 1 : index
    %c0_94 = arith.constant 0 : index
    %c0_95 = arith.constant 0 : index
    %335 = vector.load %arg13[%c1_93, %c0_94, %c0_95] : memref<2x2x32xf32, #tpu.memory_space<vmem>>, vector<1x2x32xf32>
    %336 = vector.shape_cast %335 : vector<1x2x32xf32> to vector<2x32xf32>
    %337 = vector.shape_cast %328 : vector<2x32xf32> to vector<1x2x32xf32>
    tpu.vector_store %arg13[%c1_93, %c0_94, %c0_95], %337 {strides = array<i32>} : memref<2x2x32xf32, #tpu.memory_space<vmem>>, vector<1x2x32xf32>,
    %c6_96 = arith.constant 6 : index
    %c0_97 = arith.constant 0 : index
    %338 = vector.load %arg14[%c6_96, %c0_97] : memref<16x32xf32, #tpu.memory_space<vmem>>, vector<10x32xf32>
    %c0_98 = arith.constant 0 : index
    %c0_99 = arith.constant 0 : index
    %339 = vector.load %arg9[%c0_98, %c0_99] : memref<1x32xf32, #tpu.memory_space<vmem>>, vector<1x32xf32>
    %340 = vector.broadcast %339 : vector<1x32xf32> to vector<10x32xf32>
    %341 = arith.mulf %338, %340 : vector<10x32xf32>
    %cst_100 = arith.constant dense<0.000000e+00> : vector<10xf32>
    %342 = vector.multi_reduction <add>, %341, %cst_100 [1] : vector<10x32xf32> to vector<10xf32>
    %343 = vector.shape_cast %342 : vector<10xf32> to vector<10x1xf32>
    %c0_101 = arith.constant 0 : index
    %c0_102 = arith.constant 0 : index
    %344 = vector.load %arg10[%c0_101, %c0_102] : memref<1x1xf32, #tpu.memory_space<vmem>>, vector<1x1xf32>
    %345 = vector.broadcast %344 : vector<1x1xf32> to vector<10x1xf32>
    %346 = arith.addf %343, %345 : vector<10x1xf32>
    %347 = arith.negf %346 : vector<10x1xf32>
    %348 = math.exp %347 : vector<10x1xf32>
    %cst_103 = arith.constant 1.000000e+00 : f32
    %349 = vector.broadcast %cst_103 : f32 to vector<10x1xf32>
    %350 = arith.addf %349, %348 : vector<10x1xf32>
    %351 = arith.divf %349, %350 : vector<10x1xf32>
    %c0_104 = arith.constant 0 : index
    %c0_105 = arith.constant 0 : index
    %352 = vector.load %arg11[%c0_104, %c0_105] : memref<10x1xf32, #tpu.memory_space<vmem>>, vector<10x1xf32>
    tpu.vector_store %arg11[%c0_104, %c0_105], %351 {strides = array<i32>} : memref<10x1xf32, #tpu.memory_space<vmem>>, vector<10x1xf32>,
    return
  }
}

</mosaic_0001>

<llo_original>
// kernel: sentiment_rnn_forward.1
$region0: #{sentiment_rnn_forward.1}
  #allocation0 [shape = 'u32[]', space=smem, size = 0x4, offset = 0x4, fixed_abs, tag = 'smem constant byte address 0x4 - core index']
  #allocation1 [shape = 'u32[72,128]{1,0:T(1,128)}', space=vmem, size = 0x9000, scoped, tag = 'internal scratch']
  #allocation2 [shape = 'f32[16,32]{1,0:T(8,128)}', space=vmem, size = 0x2000, scoped, tag = 'scratch operand']
  #allocation3 [shape = 'f32[1,1]{1,0:T(1,128)S(1)}', space=vmem, size = 0x200, scoped, tag = 'scoped memory for sentiment_rnn_forward.1']
  %s0 = inlined_call_operand.vmem [shape: f32[16,32], index: 0, kind: input, shape index: {}]
  %s1 = inlined_call_operand.vmem [shape: f32[2,2,32], index: 1, kind: input, shape index: {}]
  %s2 = inlined_call_operand.vmem [shape: f32[2,2,32], index: 2, kind: input, shape index: {}]
  %s3 = inlined_call_operand.vmem [shape: f32[32,128], index: 3, kind: input, shape index: {}]
  %s4 = inlined_call_operand.vmem [shape: f32[32,128], index: 4, kind: input, shape index: {}]
  %s5 = inlined_call_operand.vmem [shape: f32[32,128], index: 5, kind: input, shape index: {}]
  %s6 = inlined_call_operand.vmem [shape: f32[32,128], index: 6, kind: input, shape index: {}]
  %s7 = inlined_call_operand.vmem [shape: f32[1,128], index: 7, kind: input, shape index: {}]
  %s8 = inlined_call_operand.vmem [shape: f32[1,128], index: 8, kind: input, shape index: {}]
  %s9 = inlined_call_operand.vmem [shape: f32[1,32], index: 9, kind: input, shape index: {}]
  %s10 = inlined_call_operand.<no memory space> [shape: f32[1,1], index: 10, kind: input, shape index: {}]
  %s11 = inlined_call_operand.vmem [shape: f32[10,1], index: 11, kind: output, shape index: {0}]
  %s12 = inlined_call_operand.hbm [shape: f32[2,2,32], index: 12, kind: output, shape index: {1}]
  %s13 = inlined_call_operand.hbm [shape: f32[2,2,32], index: 13, kind: output, shape index: {2}]
  %14 = xla_tuple %s11, %s12, %s13
  %s15 = sld [smem:[#allocation0]]
  $region70: #{sentiment_rnn_forward.1} parent=0
    _
  %s17 = ssub.s32 1, %s15
  %s18 = scalar_select 0, %s17, %s15
  %v19 = vstv %s10
  %20 = vst [vmem:[#allocation3] sm:$0x1] %v19
  $region1: #{sentiment_rnn_forward.1} parent=0
    #allocation4 [shape = 'u8[2048]{0}', space=vmem, size = 0x800, scoped, tag = 'output window, operand 1, single buffered']
    #allocation5 [shape = 's32[1]{0}', space=sflag, size = 0x4, scoped, tag = 'scoped memory for sentiment_rnn_forward.1']
    #allocation6 [shape = 'u8[2048]{0}', space=vmem, size = 0x800, scoped, tag = 'output window, operand 2, single buffered']
    #allocation7 [shape = 's32[1]{0}', space=sflag, size = 0x4, scoped, tag = 'scoped memory for sentiment_rnn_forward.1']
    %21 = vsyncpa [#allocation5], 0
    %22 = vsyncpa [#allocation7], 0
    // Predicated region
    $region2: #{sentiment_rnn_forward.1} parent=1 // pred_check
      _
    $region3: #{sentiment_rnn_forward.1} parent=1 // pred_check_branch
      %24 = sbr.rel (0) target = $region5
    $region4: #{sentiment_rnn_forward.1} parent=1 // pred_region
      _
    $region5: #{sentiment_rnn_forward.1} parent=1 // pred_fallthru
      _
    // Predicated region
    $region6: #{sentiment_rnn_forward.1} parent=1 // pred_check
      _
    $region7: #{sentiment_rnn_forward.1} parent=1 // pred_check_branch
      %26 = sbr.rel (0) target = $region9
    $region8: #{sentiment_rnn_forward.1} parent=1 // pred_region
      _
    $region9: #{sentiment_rnn_forward.1} parent=1 // pred_fallthru
      _
    // Predicated region
    $region10: #{sentiment_rnn_forward.1} parent=1 // pred_check
      _
    $region11: #{sentiment_rnn_forward.1} parent=1 // pred_check_branch
      %28 = sbr.rel (0) target = $region13
    $region12: #{sentiment_rnn_forward.1} parent=1 // pred_region
      _
    $region13: #{sentiment_rnn_forward.1} parent=1 // pred_fallthru
      _
    // Predicated region
    $region14: #{sentiment_rnn_forward.1} parent=1 // pred_check
      _
    $region15: #{sentiment_rnn_forward.1} parent=1 // pred_check_branch
      %30 = sbr.rel (0) target = $region17
    $region16: #{sentiment_rnn_forward.1} parent=1 // pred_region
      _
    $region17: #{sentiment_rnn_forward.1} parent=1 // pred_fallthru
      _
    // Predicated region
    $region18: #{sentiment_rnn_forward.1} parent=1 // pred_check
      _
    $region19: #{sentiment_rnn_forward.1} parent=1 // pred_check_branch
      %32 = sbr.rel (0) target = $region21
    $region20: #{sentiment_rnn_forward.1} parent=1 // pred_region
      _
    $region21: #{sentiment_rnn_forward.1} parent=1 // pred_fallthru
      _
    // Predicated region
    $region22: #{sentiment_rnn_forward.1} parent=1 // pred_check
      _
    $region23: #{sentiment_rnn_forward.1} parent=1 // pred_check_branch
      %34 = sbr.rel (0) target = $region25
    $region24: #{sentiment_rnn_forward.1} parent=1 // pred_region
      _
    $region25: #{sentiment_rnn_forward.1} parent=1 // pred_fallthru
      _
    // Predicated region
    $region26: #{sentiment_rnn_forward.1} parent=1 // pred_check
      _
    $region27: #{sentiment_rnn_forward.1} parent=1 // pred_check_branch
      %36 = sbr.rel (0) target = $region29
    $region28: #{sentiment_rnn_forward.1} parent=1 // pred_region
      _
    $region29: #{sentiment_rnn_forward.1} parent=1 // pred_fallthru
      _
    // Predicated region
    $region30: #{sentiment_rnn_forward.1} parent=1 // pred_check
      _
    $region31: #{sentiment_rnn_forward.1} parent=1 // pred_check_branch
      %38 = sbr.rel (0) target = $region33
    $region32: #{sentiment_rnn_forward.1} parent=1 // pred_region
      _
    $region33: #{sentiment_rnn_forward.1} parent=1 // pred_fallthru
      _
    // Predicated region
    $region34: #{sentiment_rnn_forward.1} parent=1 // pred_check
      _
    $region35: #{sentiment_rnn_forward.1} parent=1 // pred_check_branch
      %40 = sbr.rel (0) target = $region37
    $region36: #{sentiment_rnn_forward.1} parent=1 // pred_region
      _
    $region37: #{sentiment_rnn_forward.1} parent=1 // pred_fallthru
      _
    // Predicated region
    $region38: #{sentiment_rnn_forward.1} parent=1 // pred_check
      _
    $region39: #{sentiment_rnn_forward.1} parent=1 // pred_check_branch
      %42 = sbr.rel (0) target = $region41
    $region40: #{sentiment_rnn_forward.1} parent=1 // pred_region
      _
    $region41: #{sentiment_rnn_forward.1} parent=1 // pred_fallthru
      _
    // Predicated region
    $region42: #{sentiment_rnn_forward.1} parent=1 // pred_check
      _
    $region43: #{sentiment_rnn_forward.1} parent=1 // pred_check_branch
      %44 = sbr.rel (0) target = $region45
    $region44: #{sentiment_rnn_forward.1} parent=1 // pred_region
      _
    $region45: #{sentiment_rnn_forward.1} parent=1 // pred_fallthru
      _
    %v45 = vld [vmem:[%s3] sm:$0xff]
    %v46 = vld [vmem:[%s3 + $0x8] sm:$0xff]
    %v47 = vld [vmem:[%s3 + $0x10] sm:$0xff]
    %v48 = vld [vmem:[%s3 + $0x18] sm:$0xff]
    %v49 = vld [vmem:[%s5] sm:$0xff]
    %v50 = vld [vmem:[%s5 + $0x8] sm:$0xff]
    %v51 = vld [vmem:[%s5 + $0x10] sm:$0xff]
    %v52 = vld [vmem:[%s5 + $0x18] sm:$0xff]
    %v53 = vld [vmem:[%s0] sm:$0xff]
    %v54 = vld [vmem:[%s0 + $0x8] sm:$0xff]
    %v55 = vld [vmem:[%s7] sm:$0x1]
    %v57 = vperm.slane %v55, 0
    %vm59 = vcmask 261120
    %v61 = vsel %vm59, %v53, 0
    %v64 = vsel %vm59, %v54, 0
    %66 = vmatpush.msra.mxu0 0.0
    %67 = vmatpush.msra.mxu0 0.0
    %68 = vmatpush.msra.mxu0 0.0
    %69 = vmatpush.msra.mxu0 0.0
    %70 = vmatpush.msra.mxu0 0.0
    %71 = vmatpush.msra.mxu0 0.0
    %72 = vmatpush.msra.mxu0 0.0
    %73 = vmatpush.msra.mxu0 0.0
    %74 = vmatpush.msra.mxu0 0.0
    %75 = vmatpush.msra.mxu0 0.0
    %76 = vmatpush.msra.mxu0 0.0
    %77 = vmatpush.msra.mxu0 0.0
    %78 = vmatpush.msra.mxu0 %v48
    %79 = vmatpush.msra.mxu0 %v47
    %80 = vmatpush.msra.mxu0 %v46
    %81 = vmatpush.msra.mxu0 %v45
    %82 = vmatmul.f32.gmra.mxu0 %v61
    %v83 = vpop.f32.mrf.mxu0
    %v84 = vadd.f32 %v57, %v83
    %85 = vmatmul.f32.gmra.mxu0 %v64
    %v86 = vpop.f32.mrf.mxu0
    %v87 = vadd.f32 %v57, %v86
    %88 = vdwg.mxu0
    %v89 = vld [vmem:[%s1] sm:$0x3]
    %v90 = vld [vmem:[%s2] sm:$0x3]
    %v92 = vsel %vm59, %v89, 0
    %94 = vmatpush.msra.mxu0 0.0
    %95 = vmatpush.msra.mxu0 0.0
    %96 = vmatpush.msra.mxu0 0.0
    %97 = vmatpush.msra.mxu0 0.0
    %98 = vmatpush.msra.mxu0 0.0
    %99 = vmatpush.msra.mxu0 0.0
    %100 = vmatpush.msra.mxu0 0.0
    %101 = vmatpush.msra.mxu0 0.0
    %102 = vmatpush.msra.mxu0 0.0
    %103 = vmatpush.msra.mxu0 0.0
    %104 = vmatpush.msra.mxu0 0.0
    %105 = vmatpush.msra.mxu0 0.0
    %106 = vmatpush.msra.mxu0 %v52
    %107 = vmatpush.msra.mxu0 %v51
    %108 = vmatpush.msra.mxu0 %v50
    %109 = vmatpush.msra.mxu0 %v49
    %110 = vmatmul.f32.gmra.mxu0 %v92
    %v111 = vpop.f32.mrf.mxu0
    %v112 = vadd.f32 0.0, %v111
    %113 = vdwg.mxu0
    %v114 = vadd.f32 %v84, %v112
    %v115 = vxor.u32 %v114, 2147483648
    %v116 = vmul.f32 %v115, 1.442695
    %v117 = vpow.pop %v116
    %v118 = vadd.f32 %v117, 1.0
    %v119 = vrcp.pop %v118
    %v120 = vmul.f32 %v118, %v119
    %v121 = vsub.f32 1.0, %v120
    %v122 = vmul.f32 %v119, %v121
    %v123 = vadd.f32 %v119, %v122
    %vm124 = vweird.f32 %v118
    %vm125 = vweird.f32 %v119
    %vm126 = vmor %vm124, %vm125
    %v127 = vsel %vm126, %v119, %v123
    %v128 = vand.u32 2147483647, %v118
    %vm129 = vcmp.eq.f32.partialorder %v128, 8.507059e+37
    %v130 = vand.u32 %v118, 2147483648
    %v131 = vor.u32 1.1754944e-38, %v130
    %v132 = vsel %vm129, %v131, %v127
    %v133 = vmul.f32 1.0, %v132
    %v134 = vtanh.pop %v114
    %136 = vrot.lane.b32.xlu0 %v90, 32
    %v137 = vpop.permute.xlu0 %136
    %v139 = vmul.f32 %v133, %v137
    %141 = vrot.lane.b32.xlu0 %v134, 64
    %v142 = vpop.permute.xlu0 %141
    %v144 = vmul.f32 %v133, %v142
    %146 = vrot.lane.b32.xlu0 %v144, 32
    %v147 = vpop.permute.xlu0 %146
    %v149 = vadd.f32 %v139, %v147
    %v150 = vtanh.pop %v149
    %152 = vrot.lane.b32.xlu0 %v150, 64
    %v153 = vpop.permute.xlu0 %152
    %v155 = vmul.f32 %v133, %v153
    %157 = vrot.lane.b32.xlu0 %v155, 32
    %v158 = vpop.permute.xlu0 %157
    %vm160 = vcmask 254976
    %161 = vst.msk [vmem:[#allocation2] sm:$0x3] %vm160, %v158
    %v162 = vsel %vm59, %v158, 0
    %164 = vmatpush.msra.mxu0 0.0
    %165 = vmatpush.msra.mxu0 0.0
    %166 = vmatpush.msra.mxu0 0.0
    %167 = vmatpush.msra.mxu0 0.0
    %168 = vmatpush.msra.mxu0 0.0
    %169 = vmatpush.msra.mxu0 0.0
    %170 = vmatpush.msra.mxu0 0.0
    %171 = vmatpush.msra.mxu0 0.0
    %172 = vmatpush.msra.mxu0 0.0
    %173 = vmatpush.msra.mxu0 0.0
    %174 = vmatpush.msra.mxu0 0.0
    %175 = vmatpush.msra.mxu0 0.0
    %176 = vmatpush.msra.mxu0 %v52
    %177 = vmatpush.msra.mxu0 %v51
    %178 = vmatpush.msra.mxu0 %v50
    %179 = vmatpush.msra.mxu0 %v49
    %180 = vmatmul.f32.gmra.mxu0 %v162
    %v181 = vpop.f32.mrf.mxu0
    %v182 = vadd.f32 0.0, %v181
    %183 = vdwg.mxu0
    %v185 = vrot.slane %v182, 6
    %v187 = vadd.f32 %v84, %v185
    %v188 = vxor.u32 %v187, 2147483648
    %v189 = vmul.f32 %v188, 1.442695
    %v190 = vpow.pop %v189
    %v191 = vadd.f32 %v190, 1.0
    %v192 = vrcp.pop %v191
    %v193 = vmul.f32 %v191, %v192
    %v194 = vsub.f32 1.0, %v193
    %v195 = vmul.f32 %v192, %v194
    %v196 = vadd.f32 %v192, %v195
    %vm197 = vweird.f32 %v191
    %vm198 = vweird.f32 %v192
    %vm199 = vmor %vm197, %vm198
    %v200 = vsel %vm199, %v192, %v196
    %v201 = vand.u32 2147483647, %v191
    %vm202 = vcmp.eq.f32.partialorder %v201, 8.507059e+37
    %v203 = vand.u32 %v191, 2147483648
    %v204 = vor.u32 1.1754944e-38, %v203
    %v205 = vsel %vm202, %v204, %v200
    %v206 = vmul.f32 1.0, %v205
    %v207 = vtanh.pop %v187
    %v209 = vrot.slane %v149, 6
    %v211 = vmul.f32 %v206, %v209
    %213 = vrot.lane.b32.xlu0 %v207, 64
    %v214 = vpop.permute.xlu0 %213
    %v216 = vmul.f32 %v206, %v214
    %218 = vrot.lane.b32.xlu0 %v216, 32
    %v219 = vpop.permute.xlu0 %218
    %v221 = vadd.f32 %v211, %v219
    %v222 = vtanh.pop %v221
    %224 = vrot.lane.b32.xlu0 %v222, 64
    %v225 = vpop.permute.xlu0 %224
    %v227 = vmul.f32 %v206, %v225
    %229 = vrot.lane.b32.xlu0 %v227, 32
    %v230 = vpop.permute.xlu0 %229
    %vm232 = vcmask 257026
    %233 = vst.msk [vmem:[#allocation2] sm:$0xc] %vm232, %v230
    %v234 = vrot.slane %v227, 2
    %235 = vrot.lane.b32.xlu0 %v234, 32
    %v236 = vpop.permute.xlu0 %235
    %v237 = vsel %vm59, %v236, 0
    %239 = vmatpush.msra.mxu0 0.0
    %240 = vmatpush.msra.mxu0 0.0
    %241 = vmatpush.msra.mxu0 0.0
    %242 = vmatpush.msra.mxu0 0.0
    %243 = vmatpush.msra.mxu0 0.0
    %244 = vmatpush.msra.mxu0 0.0
    %245 = vmatpush.msra.mxu0 0.0
    %246 = vmatpush.msra.mxu0 0.0
    %247 = vmatpush.msra.mxu0 0.0
    %248 = vmatpush.msra.mxu0 0.0
    %249 = vmatpush.msra.mxu0 0.0
    %250 = vmatpush.msra.mxu0 0.0
    %251 = vmatpush.msra.mxu0 %v52
    %252 = vmatpush.msra.mxu0 %v51
    %253 = vmatpush.msra.mxu0 %v50
    %254 = vmatpush.msra.mxu0 %v49
    %255 = vmatmul.f32.gmra.mxu0 %v237
    %v256 = vpop.f32.mrf.mxu0
    %v257 = vadd.f32 0.0, %v256
    %258 = vdwg.mxu0
    %v260 = vrot.slane %v257, 4
    %v262 = vadd.f32 %v84, %v260
    %v263 = vxor.u32 %v262, 2147483648
    %v264 = vmul.f32 %v263, 1.442695
    %v265 = vpow.pop %v264
    %v266 = vadd.f32 %v265, 1.0
    %v267 = vrcp.pop %v266
    %v268 = vmul.f32 %v266, %v267
    %v269 = vsub.f32 1.0, %v268
    %v270 = vmul.f32 %v267, %v269
    %v271 = vadd.f32 %v267, %v270
    %vm272 = vweird.f32 %v266
    %vm273 = vweird.f32 %v267
    %vm274 = vmor %vm272, %vm273
    %v275 = vsel %vm274, %v267, %v271
    %v276 = vand.u32 2147483647, %v266
    %vm277 = vcmp.eq.f32.partialorder %v276, 8.507059e+37
    %v278 = vand.u32 %v266, 2147483648
    %v279 = vor.u32 1.1754944e-38, %v278
    %v280 = vsel %vm277, %v279, %v275
    %v281 = vmul.f32 1.0, %v280
    %v282 = vtanh.pop %v262
    %v284 = vrot.slane %v221, 6
    %v286 = vmul.f32 %v281, %v284
    %288 = vrot.lane.b32.xlu0 %v282, 64
    %v289 = vpop.permute.xlu0 %288
    %v291 = vmul.f32 %v281, %v289
    %293 = vrot.lane.b32.xlu0 %v291, 32
    %v294 = vpop.permute.xlu0 %293
    %v296 = vadd.f32 %v286, %v294
    %v297 = vtanh.pop %v296
    %299 = vrot.lane.b32.xlu0 %v297, 64
    %v300 = vpop.permute.xlu0 %299
    %v302 = vmul.f32 %v281, %v300
    %304 = vrot.lane.b32.xlu0 %v302, 32
    %v305 = vpop.permute.xlu0 %304
    %vm307 = vcmask 259076
    %308 = vst.msk [vmem:[#allocation2] sm:$0x30] %vm307, %v305
    %v309 = vrot.slane %v302, 4
    %310 = vrot.lane.b32.xlu0 %v309, 32
    %v311 = vpop.permute.xlu0 %310
    %v312 = vsel %vm59, %v311, 0
    %314 = vmatpush.msra.mxu0 0.0
    %315 = vmatpush.msra.mxu0 0.0
    %316 = vmatpush.msra.mxu0 0.0
    %317 = vmatpush.msra.mxu0 0.0
    %318 = vmatpush.msra.mxu0 0.0
    %319 = vmatpush.msra.mxu0 0.0
    %320 = vmatpush.msra.mxu0 0.0
    %321 = vmatpush.msra.mxu0 0.0
    %322 = vmatpush.msra.mxu0 0.0
    %323 = vmatpush.msra.mxu0 0.0
    %324 = vmatpush.msra.mxu0 0.0
    %325 = vmatpush.msra.mxu0 0.0
    %326 = vmatpush.msra.mxu0 %v52
    %327 = vmatpush.msra.mxu0 %v51
    %328 = vmatpush.msra.mxu0 %v50
    %329 = vmatpush.msra.mxu0 %v49
    %330 = vmatmul.f32.gmra.mxu0 %v312
    %v331 = vpop.f32.mrf.mxu0
    %v332 = vadd.f32 0.0, %v331
    %333 = vdwg.mxu0
    %v335 = vrot.slane %v332, 2
    %v337 = vadd.f32 %v84, %v335
    %v338 = vxor.u32 %v337, 2147483648
    %v339 = vmul.f32 %v338, 1.442695
    %v340 = vpow.pop %v339
    %v341 = vadd.f32 %v340, 1.0
    %v342 = vrcp.pop %v341
    %v343 = vmul.f32 %v341, %v342
    %v344 = vsub.f32 1.0, %v343
    %v345 = vmul.f32 %v342, %v344
    %v346 = vadd.f32 %v342, %v345
    %vm347 = vweird.f32 %v341
    %vm348 = vweird.f32 %v342
    %vm349 = vmor %vm347, %vm348
    %v350 = vsel %vm349, %v342, %v346
    %v351 = vand.u32 2147483647, %v341
    %vm352 = vcmp.eq.f32.partialorder %v351, 8.507059e+37
    %v353 = vand.u32 %v341, 2147483648
    %v354 = vor.u32 1.1754944e-38, %v353
    %v355 = vsel %vm352, %v354, %v350
    %v356 = vmul.f32 1.0, %v355
    %v357 = vtanh.pop %v337
    %v359 = vrot.slane %v296, 6
    %v361 = vmul.f32 %v356, %v359
    %363 = vrot.lane.b32.xlu0 %v357, 64
    %v364 = vpop.permute.xlu0 %363
    %v366 = vmul.f32 %v356, %v364
    %368 = vrot.lane.b32.xlu0 %v366, 32
    %v369 = vpop.permute.xlu0 %368
    %v371 = vadd.f32 %v361, %v369
    %v372 = vtanh.pop %v371
    %374 = vrot.lane.b32.xlu0 %v372, 64
    %v375 = vpop.permute.xlu0 %374
    %v377 = vmul.f32 %v356, %v375
    %379 = vrot.lane.b32.xlu0 %v377, 32
    %v380 = vpop.permute.xlu0 %379
    %vm382 = vcmask 261126
    %383 = vst.msk [vmem:[#allocation2] sm:$0xc0] %vm382, %v380
    %v384 = vrot.slane %v377, 6
    %385 = vrot.lane.b32.xlu0 %v384, 32
    %v386 = vpop.permute.xlu0 %385
    %v387 = vsel %vm59, %v386, 0
    %389 = vmatpush.msra.mxu0 0.0
    %390 = vmatpush.msra.mxu0 0.0
    %391 = vmatpush.msra.mxu0 0.0
    %392 = vmatpush.msra.mxu0 0.0
    %393 = vmatpush.msra.mxu0 0.0
    %394 = vmatpush.msra.mxu0 0.0
    %395 = vmatpush.msra.mxu0 0.0
    %396 = vmatpush.msra.mxu0 0.0
    %397 = vmatpush.msra.mxu0 0.0
    %398 = vmatpush.msra.mxu0 0.0
    %399 = vmatpush.msra.mxu0 0.0
    %400 = vmatpush.msra.mxu0 0.0
    %401 = vmatpush.msra.mxu0 %v52
    %402 = vmatpush.msra.mxu0 %v51
    %403 = vmatpush.msra.mxu0 %v50
    %404 = vmatpush.msra.mxu0 %v49
    %405 = vmatmul.f32.gmra.mxu0 %v387
    %v406 = vpop.f32.mrf.mxu0
    %v407 = vadd.f32 0.0, %v406
    %408 = vdwg.mxu0
    %v409 = vadd.f32 %v87, %v407
    %v410 = vxor.u32 %v409, 2147483648
    %v411 = vmul.f32 %v410, 1.442695
    %v412 = vpow.pop %v411
    %v413 = vadd.f32 %v412, 1.0
    %v414 = vrcp.pop %v413
    %v415 = vmul.f32 %v413, %v414
    %v416 = vsub.f32 1.0, %v415
    %v417 = vmul.f32 %v414, %v416
    %v418 = vadd.f32 %v414, %v417
    %vm419 = vweird.f32 %v413
    %vm420 = vweird.f32 %v414
    %vm421 = vmor %vm419, %vm420
    %v422 = vsel %vm421, %v414, %v418
    %v423 = vand.u32 2147483647, %v413
    %vm424 = vcmp.eq.f32.partialorder %v423, 8.507059e+37
    %v425 = vand.u32 %v413, 2147483648
    %v426 = vor.u32 1.1754944e-38, %v425
    %v427 = vsel %vm424, %v426, %v422
    %v428 = vmul.f32 1.0, %v427
    %v429 = vtanh.pop %v409
    %v431 = vrot.slane %v371, 6
    %v433 = vmul.f32 %v428, %v431
    %435 = vrot.lane.b32.xlu0 %v429, 64
    %v436 = vpop.permute.xlu0 %435
    %v438 = vmul.f32 %v428, %v436
    %440 = vrot.lane.b32.xlu0 %v438, 32
    %v441 = vpop.permute.xlu0 %440
    %v443 = vadd.f32 %v433, %v441
    %v444 = vtanh.pop %v443
    %446 = vrot.lane.b32.xlu0 %v444, 64
    %v447 = vpop.permute.xlu0 %446
    %v449 = vmul.f32 %v428, %v447
    %451 = vrot.lane.b32.xlu0 %v449, 32
    %v452 = vpop.permute.xlu0 %451
    %454 = vst.msk [vmem:[#allocation2 + $0x8] sm:$0x3] %vm160, %v452
    %v455 = vsel %vm59, %v452, 0
    %457 = vmatpush.msra.mxu0 0.0
    %458 = vmatpush.msra.mxu0 0.0
    %459 = vmatpush.msra.mxu0 0.0
    %460 = vmatpush.msra.mxu0 0.0
    %461 = vmatpush.msra.mxu0 0.0
    %462 = vmatpush.msra.mxu0 0.0
    %463 = vmatpush.msra.mxu0 0.0
    %464 = vmatpush.msra.mxu0 0.0
    %465 = vmatpush.msra.mxu0 0.0
    %466 = vmatpush.msra.mxu0 0.0
    %467 = vmatpush.msra.mxu0 0.0
    %468 = vmatpush.msra.mxu0 0.0
    %469 = vmatpush.msra.mxu0 %v52
    %470 = vmatpush.msra.mxu0 %v51
    %471 = vmatpush.msra.mxu0 %v50
    %472 = vmatpush.msra.mxu0 %v49
    %473 = vmatmul.f32.gmra.mxu0 %v455
    %v474 = vpop.f32.mrf.mxu0
    %v475 = vadd.f32 0.0, %v474
    %476 = vdwg.mxu0
    %v478 = vrot.slane %v475, 6
    %v480 = vadd.f32 %v87, %v478
    %v481 = vxor.u32 %v480, 2147483648
    %v482 = vmul.f32 %v481, 1.442695
    %v483 = vpow.pop %v482
    %v484 = vadd.f32 %v483, 1.0
    %v485 = vrcp.pop %v484
    %v486 = vmul.f32 %v484, %v485
    %v487 = vsub.f32 1.0, %v486
    %v488 = vmul.f32 %v485, %v487
    %v489 = vadd.f32 %v485, %v488
    %vm490 = vweird.f32 %v484
    %vm491 = vweird.f32 %v485
    %vm492 = vmor %vm490, %vm491
    %v493 = vsel %vm492, %v485, %v489
    %v494 = vand.u32 2147483647, %v484
    %vm495 = vcmp.eq.f32.partialorder %v494, 8.507059e+37
    %v496 = vand.u32 %v484, 2147483648
    %v497 = vor.u32 1.1754944e-38, %v496
    %v498 = vsel %vm495, %v497, %v493
    %v499 = vmul.f32 1.0, %v498
    %v500 = vtanh.pop %v480
    %v502 = vrot.slane %v443, 6
    %v504 = vmul.f32 %v499, %v502
    %506 = vrot.lane.b32.xlu0 %v500, 64
    %v507 = vpop.permute.xlu0 %506
    %v509 = vmul.f32 %v499, %v507
    %511 = vrot.lane.b32.xlu0 %v509, 32
    %v512 = vpop.permute.xlu0 %511
    %v514 = vadd.f32 %v504, %v512
    %v515 = vtanh.pop %v514
    %517 = vrot.lane.b32.xlu0 %v515, 64
    %v518 = vpop.permute.xlu0 %517
    %v520 = vmul.f32 %v499, %v518
    %522 = vrot.lane.b32.xlu0 %v520, 32
    %v523 = vpop.permute.xlu0 %522
    %525 = vst.msk [vmem:[#allocation2 + $0x8] sm:$0xc] %vm232, %v523
    %v526 = vrot.slane %v520, 2
    %527 = vrot.lane.b32.xlu0 %v526, 32
    %v528 = vpop.permute.xlu0 %527
    %v529 = vsel %vm59, %v528, 0
    %531 = vmatpush.msra.mxu0 0.0
    %532 = vmatpush.msra.mxu0 0.0
    %533 = vmatpush.msra.mxu0 0.0
    %534 = vmatpush.msra.mxu0 0.0
    %535 = vmatpush.msra.mxu0 0.0
    %536 = vmatpush.msra.mxu0 0.0
    %537 = vmatpush.msra.mxu0 0.0
    %538 = vmatpush.msra.mxu0 0.0
    %539 = vmatpush.msra.mxu0 0.0
    %540 = vmatpush.msra.mxu0 0.0
    %541 = vmatpush.msra.mxu0 0.0
    %542 = vmatpush.msra.mxu0 0.0
    %543 = vmatpush.msra.mxu0 %v52
    %544 = vmatpush.msra.mxu0 %v51
    %545 = vmatpush.msra.mxu0 %v50
    %546 = vmatpush.msra.mxu0 %v49
    %547 = vmatmul.f32.gmra.mxu0 %v529
    %v548 = vpop.f32.mrf.mxu0
    %v549 = vadd.f32 0.0, %v548
    %550 = vdwg.mxu0
    %v552 = vrot.slane %v549, 4
    %v554 = vadd.f32 %v87, %v552
    %v555 = vxor.u32 %v554, 2147483648
    %v556 = vmul.f32 %v555, 1.442695
    %v557 = vpow.pop %v556
    %v558 = vadd.f32 %v557, 1.0
    %v559 = vrcp.pop %v558
    %v560 = vmul.f32 %v558, %v559
    %v561 = vsub.f32 1.0, %v560
    %v562 = vmul.f32 %v559, %v561
    %v563 = vadd.f32 %v559, %v562
    %vm564 = vweird.f32 %v558
    %vm565 = vweird.f32 %v559
    %vm566 = vmor %vm564, %vm565
    %v567 = vsel %vm566, %v559, %v563
    %v568 = vand.u32 2147483647, %v558
    %vm569 = vcmp.eq.f32.partialorder %v568, 8.507059e+37
    %v570 = vand.u32 %v558, 2147483648
    %v571 = vor.u32 1.1754944e-38, %v570
    %v572 = vsel %vm569, %v571, %v567
    %v573 = vmul.f32 1.0, %v572
    %v574 = vtanh.pop %v554
    %v576 = vrot.slane %v514, 6
    %v578 = vmul.f32 %v573, %v576
    %580 = vrot.lane.b32.xlu0 %v574, 64
    %v581 = vpop.permute.xlu0 %580
    %v583 = vmul.f32 %v573, %v581
    %585 = vrot.lane.b32.xlu0 %v583, 32
    %v586 = vpop.permute.xlu0 %585
    %v588 = vadd.f32 %v578, %v586
    %v589 = vtanh.pop %v588
    %591 = vrot.lane.b32.xlu0 %v589, 64
    %v592 = vpop.permute.xlu0 %591
    %v594 = vmul.f32 %v573, %v592
    %596 = vrot.lane.b32.xlu0 %v594, 32
    %v597 = vpop.permute.xlu0 %596
    %599 = vst.msk [vmem:[#allocation2 + $0x8] sm:$0x30] %vm307, %v597
    %v600 = vrot.slane %v594, 4
    %601 = vrot.lane.b32.xlu0 %v600, 32
    %v602 = vpop.permute.xlu0 %601
    %v603 = vsel %vm59, %v602, 0
    %605 = vmatpush.msra.mxu0 0.0
    %606 = vmatpush.msra.mxu0 0.0
    %607 = vmatpush.msra.mxu0 0.0
    %608 = vmatpush.msra.mxu0 0.0
    %609 = vmatpush.msra.mxu0 0.0
    %610 = vmatpush.msra.mxu0 0.0
    %611 = vmatpush.msra.mxu0 0.0
    %612 = vmatpush.msra.mxu0 0.0
    %613 = vmatpush.msra.mxu0 0.0
    %614 = vmatpush.msra.mxu0 0.0
    %615 = vmatpush.msra.mxu0 0.0
    %616 = vmatpush.msra.mxu0 0.0
    %617 = vmatpush.msra.mxu0 %v52
    %618 = vmatpush.msra.mxu0 %v51
    %619 = vmatpush.msra.mxu0 %v50
    %620 = vmatpush.msra.mxu0 %v49
    %621 = vmatmul.f32.gmra.mxu0 %v603
    %v622 = vpop.f32.mrf.mxu0
    %v623 = vadd.f32 0.0, %v622
    %624 = vdwg.mxu0
    %v626 = vrot.slane %v623, 2
    %v628 = vadd.f32 %v87, %v626
    %v629 = vxor.u32 %v628, 2147483648
    %v630 = vmul.f32 %v629, 1.442695
    %v631 = vpow.pop %v630
    %v632 = vadd.f32 %v631, 1.0
    %v633 = vrcp.pop %v632
    %v634 = vmul.f32 %v632, %v633
    %v635 = vsub.f32 1.0, %v634
    %v636 = vmul.f32 %v633, %v635
    %v637 = vadd.f32 %v633, %v636
    %vm638 = vweird.f32 %v632
    %vm639 = vweird.f32 %v633
    %vm640 = vmor %vm638, %vm639
    %v641 = vsel %vm640, %v633, %v637
    %v642 = vand.u32 2147483647, %v632
    %vm643 = vcmp.eq.f32.partialorder %v642, 8.507059e+37
    %v644 = vand.u32 %v632, 2147483648
    %v645 = vor.u32 1.1754944e-38, %v644
    %v646 = vsel %vm643, %v645, %v641
    %v647 = vmul.f32 1.0, %v646
    %v648 = vtanh.pop %v628
    %v650 = vrot.slane %v588, 6
    %v652 = vmul.f32 %v647, %v650
    %654 = vrot.lane.b32.xlu0 %v648, 64
    %v655 = vpop.permute.xlu0 %654
    %v657 = vmul.f32 %v647, %v655
    %659 = vrot.lane.b32.xlu0 %v657, 32
    %v660 = vpop.permute.xlu0 %659
    %v662 = vadd.f32 %v652, %v660
    %v663 = vtanh.pop %v662
    %665 = vrot.lane.b32.xlu0 %v663, 64
    %v666 = vpop.permute.xlu0 %665
    %v668 = vmul.f32 %v647, %v666
    %670 = vrot.lane.b32.xlu0 %v668, 32
    %v671 = vpop.permute.xlu0 %670
    %673 = vst.msk [vmem:[#allocation2 + $0x8] sm:$0xc0] %vm382, %v671
    %674 = vst.msk [vmem:[#allocation4 - $0x6] sm:$0xc0] %vm382, %v671
    %676 = vrot.lane.b32.xlu0 %v662, 96
    %v677 = vpop.permute.xlu0 %676
    %679 = vst.msk [vmem:[#allocation6 - $0x6] sm:$0xc0] %vm382, %v677
    %v680 = vld [vmem:[%s4] sm:$0xff]
    %v681 = vld [vmem:[%s4 + $0x8] sm:$0xff]
    %v682 = vld [vmem:[%s4 + $0x10] sm:$0xff]
    %v683 = vld [vmem:[%s4 + $0x18] sm:$0xff]
    %v684 = vld [vmem:[%s6] sm:$0xff]
    %v685 = vld [vmem:[%s6 + $0x8] sm:$0xff]
    %v686 = vld [vmem:[%s6 + $0x10] sm:$0xff]
    %v687 = vld [vmem:[%s6 + $0x18] sm:$0xff]
    %v688 = vld [vmem:[#allocation2] sm:$0xff]
    %v689 = vld [vmem:[#allocation2 + $0x8] sm:$0xff]
    %v690 = vld [vmem:[%s8] sm:$0x1]
    %v692 = vperm.slane %v690, 0
    %v695 = vsel %vm59, %v688, 0
    %v698 = vsel %vm59, %v689, 0
    %700 = vmatpush.msra.mxu0 0.0
    %701 = vmatpush.msra.mxu0 0.0
    %702 = vmatpush.msra.mxu0 0.0
    %703 = vmatpush.msra.mxu0 0.0
    %704 = vmatpush.msra.mxu0 0.0
    %705 = vmatpush.msra.mxu0 0.0
    %706 = vmatpush.msra.mxu0 0.0
    %707 = vmatpush.msra.mxu0 0.0
    %708 = vmatpush.msra.mxu0 0.0
    %709 = vmatpush.msra.mxu0 0.0
    %710 = vmatpush.msra.mxu0 0.0
    %711 = vmatpush.msra.mxu0 0.0
    %712 = vmatpush.msra.mxu0 %v683
    %713 = vmatpush.msra.mxu0 %v682
    %714 = vmatpush.msra.mxu0 %v681
    %715 = vmatpush.msra.mxu0 %v680
    %716 = vmatmul.f32.gmra.mxu0 %v695
    %v717 = vpop.f32.mrf.mxu0
    %v718 = vadd.f32 %v692, %v717
    %719 = vmatmul.f32.gmra.mxu0 %v698
    %v720 = vpop.f32.mrf.mxu0
    %v721 = vadd.f32 %v692, %v720
    %722 = vdwg.mxu0
    %s723 = scalar_lea.vmem %s1, 2
    %v724 = vld [vmem:[%s723] sm:$0x3]
    %s725 = scalar_lea.vmem %s2, 2
    %v726 = vld [vmem:[%s725] sm:$0x3]
    %v728 = vsel %vm59, %v724, 0
    %730 = vmatpush.msra.mxu0 0.0
    %731 = vmatpush.msra.mxu0 0.0
    %732 = vmatpush.msra.mxu0 0.0
    %733 = vmatpush.msra.mxu0 0.0
    %734 = vmatpush.msra.mxu0 0.0
    %735 = vmatpush.msra.mxu0 0.0
    %736 = vmatpush.msra.mxu0 0.0
    %737 = vmatpush.msra.mxu0 0.0
    %738 = vmatpush.msra.mxu0 0.0
    %739 = vmatpush.msra.mxu0 0.0
    %740 = vmatpush.msra.mxu0 0.0
    %741 = vmatpush.msra.mxu0 0.0
    %742 = vmatpush.msra.mxu0 %v687
    %743 = vmatpush.msra.mxu0 %v686
    %744 = vmatpush.msra.mxu0 %v685
    %745 = vmatpush.msra.mxu0 %v684
    %746 = vmatmul.f32.gmra.mxu0 %v728
    %v747 = vpop.f32.mrf.mxu0
    %v748 = vadd.f32 0.0, %v747
    %749 = vdwg.mxu0
    %v750 = vadd.f32 %v718, %v748
    %v751 = vxor.u32 %v750, 2147483648
    %v752 = vmul.f32 %v751, 1.442695
    %v753 = vpow.pop %v752
    %v754 = vadd.f32 %v753, 1.0
    %v755 = vrcp.pop %v754
    %v756 = vmul.f32 %v754, %v755
    %v757 = vsub.f32 1.0, %v756
    %v758 = vmul.f32 %v755, %v757
    %v759 = vadd.f32 %v755, %v758
    %vm760 = vweird.f32 %v754
    %vm761 = vweird.f32 %v755
    %vm762 = vmor %vm760, %vm761
    %v763 = vsel %vm762, %v755, %v759
    %v764 = vand.u32 2147483647, %v754
    %vm765 = vcmp.eq.f32.partialorder %v764, 8.507059e+37
    %v766 = vand.u32 %v754, 2147483648
    %v767 = vor.u32 1.1754944e-38, %v766
    %v768 = vsel %vm765, %v767, %v763
    %v769 = vmul.f32 1.0, %v768
    %v770 = vtanh.pop %v750
    %772 = vrot.lane.b32.xlu0 %v726, 32
    %v773 = vpop.permute.xlu0 %772
    %v775 = vmul.f32 %v769, %v773
    %777 = vrot.lane.b32.xlu0 %v770, 64
    %v778 = vpop.permute.xlu0 %777
    %v780 = vmul.f32 %v769, %v778
    %782 = vrot.lane.b32.xlu0 %v780, 32
    %v783 = vpop.permute.xlu0 %782
    %v785 = vadd.f32 %v775, %v783
    %v786 = vtanh.pop %v785
    %788 = vrot.lane.b32.xlu0 %v786, 64
    %v789 = vpop.permute.xlu0 %788
    %v791 = vmul.f32 %v769, %v789
    %793 = vrot.lane.b32.xlu0 %v791, 32
    %v794 = vpop.permute.xlu0 %793
    %796 = vst.msk [vmem:[#allocation2] sm:$0x3] %vm160, %v794
    %v797 = vsel %vm59, %v794, 0
    %799 = vmatpush.msra.mxu0 0.0
    %800 = vmatpush.msra.mxu0 0.0
    %801 = vmatpush.msra.mxu0 0.0
    %802 = vmatpush.msra.mxu0 0.0
    %803 = vmatpush.msra.mxu0 0.0
    %804 = vmatpush.msra.mxu0 0.0
    %805 = vmatpush.msra.mxu0 0.0
    %806 = vmatpush.msra.mxu0 0.0
    %807 = vmatpush.msra.mxu0 0.0
    %808 = vmatpush.msra.mxu0 0.0
    %809 = vmatpush.msra.mxu0 0.0
    %810 = vmatpush.msra.mxu0 0.0
    %811 = vmatpush.msra.mxu0 %v687
    %812 = vmatpush.msra.mxu0 %v686
    %813 = vmatpush.msra.mxu0 %v685
    %814 = vmatpush.msra.mxu0 %v684
    %815 = vmatmul.f32.gmra.mxu0 %v797
    %v816 = vpop.f32.mrf.mxu0
    %v817 = vadd.f32 0.0, %v816
    %818 = vdwg.mxu0
    %v820 = vrot.slane %v817, 6
    %v822 = vadd.f32 %v718, %v820
    %v823 = vxor.u32 %v822, 2147483648
    %v824 = vmul.f32 %v823, 1.442695
    %v825 = vpow.pop %v824
    %v826 = vadd.f32 %v825, 1.0
    %v827 = vrcp.pop %v826
    %v828 = vmul.f32 %v826, %v827
    %v829 = vsub.f32 1.0, %v828
    %v830 = vmul.f32 %v827, %v829
    %v831 = vadd.f32 %v827, %v830
    %vm832 = vweird.f32 %v826
    %vm833 = vweird.f32 %v827
    %vm834 = vmor %vm832, %vm833
    %v835 = vsel %vm834, %v827, %v831
    %v836 = vand.u32 2147483647, %v826
    %vm837 = vcmp.eq.f32.partialorder %v836, 8.507059e+37
    %v838 = vand.u32 %v826, 2147483648
    %v839 = vor.u32 1.1754944e-38, %v838
    %v840 = vsel %vm837, %v839, %v835
    %v841 = vmul.f32 1.0, %v840
    %v842 = vtanh.pop %v822
    %v844 = vrot.slane %v785, 6
    %v846 = vmul.f32 %v841, %v844
    %848 = vrot.lane.b32.xlu0 %v842, 64
    %v849 = vpop.permute.xlu0 %848
    %v851 = vmul.f32 %v841, %v849
    %853 = vrot.lane.b32.xlu0 %v851, 32
    %v854 = vpop.permute.xlu0 %853
    %v856 = vadd.f32 %v846, %v854
    %v857 = vtanh.pop %v856
    %859 = vrot.lane.b32.xlu0 %v857, 64
    %v860 = vpop.permute.xlu0 %859
    %v862 = vmul.f32 %v841, %v860
    %864 = vrot.lane.b32.xlu0 %v862, 32
    %v865 = vpop.permute.xlu0 %864
    %867 = vst.msk [vmem:[#allocation2] sm:$0xc] %vm232, %v865
    %v868 = vrot.slane %v862, 2
    %869 = vrot.lane.b32.xlu0 %v868, 32
    %v870 = vpop.permute.xlu0 %869
    %v871 = vsel %vm59, %v870, 0
    %873 = vmatpush.msra.mxu0 0.0
    %874 = vmatpush.msra.mxu0 0.0
    %875 = vmatpush.msra.mxu0 0.0
    %876 = vmatpush.msra.mxu0 0.0
    %877 = vmatpush.msra.mxu0 0.0
    %878 = vmatpush.msra.mxu0 0.0
    %879 = vmatpush.msra.mxu0 0.0
    %880 = vmatpush.msra.mxu0 0.0
    %881 = vmatpush.msra.mxu0 0.0
    %882 = vmatpush.msra.mxu0 0.0
    %883 = vmatpush.msra.mxu0 0.0
    %884 = vmatpush.msra.mxu0 0.0
    %885 = vmatpush.msra.mxu0 %v687
    %886 = vmatpush.msra.mxu0 %v686
    %887 = vmatpush.msra.mxu0 %v685
    %888 = vmatpush.msra.mxu0 %v684
    %889 = vmatmul.f32.gmra.mxu0 %v871
    %v890 = vpop.f32.mrf.mxu0
    %v891 = vadd.f32 0.0, %v890
    %892 = vdwg.mxu0
    %v894 = vrot.slane %v891, 4
    %v896 = vadd.f32 %v718, %v894
    %v897 = vxor.u32 %v896, 2147483648
    %v898 = vmul.f32 %v897, 1.442695
    %v899 = vpow.pop %v898
    %v900 = vadd.f32 %v899, 1.0
    %v901 = vrcp.pop %v900
    %v902 = vmul.f32 %v900, %v901
    %v903 = vsub.f32 1.0, %v902
    %v904 = vmul.f32 %v901, %v903
    %v905 = vadd.f32 %v901, %v904
    %vm906 = vweird.f32 %v900
    %vm907 = vweird.f32 %v901
    %vm908 = vmor %vm906, %vm907
    %v909 = vsel %vm908, %v901, %v905
    %v910 = vand.u32 2147483647, %v900
    %vm911 = vcmp.eq.f32.partialorder %v910, 8.507059e+37
    %v912 = vand.u32 %v900, 2147483648
    %v913 = vor.u32 1.1754944e-38, %v912
    %v914 = vsel %vm911, %v913, %v909
    %v915 = vmul.f32 1.0, %v914
    %v916 = vtanh.pop %v896
    %v918 = vrot.slane %v856, 6
    %v920 = vmul.f32 %v915, %v918
    %922 = vrot.lane.b32.xlu0 %v916, 64
    %v923 = vpop.permute.xlu0 %922
    %v925 = vmul.f32 %v915, %v923
    %927 = vrot.lane.b32.xlu0 %v925, 32
    %v928 = vpop.permute.xlu0 %927
    %v930 = vadd.f32 %v920, %v928
    %v931 = vtanh.pop %v930
    %933 = vrot.lane.b32.xlu0 %v931, 64
    %v934 = vpop.permute.xlu0 %933
    %v936 = vmul.f32 %v915, %v934
    %938 = vrot.lane.b32.xlu0 %v936, 32
    %v939 = vpop.permute.xlu0 %938
    %941 = vst.msk [vmem:[#allocation2] sm:$0x30] %vm307, %v939
    %v942 = vrot.slane %v936, 4
    %943 = vrot.lane.b32.xlu0 %v942, 32
    %v944 = vpop.permute.xlu0 %943
    %v945 = vsel %vm59, %v944, 0
    %947 = vmatpush.msra.mxu0 0.0
    %948 = vmatpush.msra.mxu0 0.0
    %949 = vmatpush.msra.mxu0 0.0
    %950 = vmatpush.msra.mxu0 0.0
    %951 = vmatpush.msra.mxu0 0.0
    %952 = vmatpush.msra.mxu0 0.0
    %953 = vmatpush.msra.mxu0 0.0
    %954 = vmatpush.msra.mxu0 0.0
    %955 = vmatpush.msra.mxu0 0.0
    %956 = vmatpush.msra.mxu0 0.0
    %957 = vmatpush.msra.mxu0 0.0
    %958 = vmatpush.msra.mxu0 0.0
    %959 = vmatpush.msra.mxu0 %v687
    %960 = vmatpush.msra.mxu0 %v686
    %961 = vmatpush.msra.mxu0 %v685
    %962 = vmatpush.msra.mxu0 %v684
    %963 = vmatmul.f32.gmra.mxu0 %v945
    %v964 = vpop.f32.mrf.mxu0
    %v965 = vadd.f32 0.0, %v964
    %966 = vdwg.mxu0
    %v968 = vrot.slane %v965, 2
    %v970 = vadd.f32 %v718, %v968
    %v971 = vxor.u32 %v970, 2147483648
    %v972 = vmul.f32 %v971, 1.442695
    %v973 = vpow.pop %v972
    %v974 = vadd.f32 %v973, 1.0
    %v975 = vrcp.pop %v974
    %v976 = vmul.f32 %v974, %v975
    %v977 = vsub.f32 1.0, %v976
    %v978 = vmul.f32 %v975, %v977
    %v979 = vadd.f32 %v975, %v978
    %vm980 = vweird.f32 %v974
    %vm981 = vweird.f32 %v975
    %vm982 = vmor %vm980, %vm981
    %v983 = vsel %vm982, %v975, %v979
    %v984 = vand.u32 2147483647, %v974
    %vm985 = vcmp.eq.f32.partialorder %v984, 8.507059e+37
    %v986 = vand.u32 %v974, 2147483648
    %v987 = vor.u32 1.1754944e-38, %v986
    %v988 = vsel %vm985, %v987, %v983
    %v989 = vmul.f32 1.0, %v988
    %v990 = vtanh.pop %v970
    %v992 = vrot.slane %v930, 6
    %v994 = vmul.f32 %v989, %v992
    %996 = vrot.lane.b32.xlu0 %v990, 64
    %v997 = vpop.permute.xlu0 %996
    %v999 = vmul.f32 %v989, %v997
    %1001 = vrot.lane.b32.xlu0 %v999, 32
    %v1002 = vpop.permute.xlu0 %1001
    %v1004 = vadd.f32 %v994, %v1002
    %v1005 = vtanh.pop %v1004
    %1007 = vrot.lane.b32.xlu0 %v1005, 64
    %v1008 = vpop.permute.xlu0 %1007
    %v1010 = vmul.f32 %v989, %v1008
    %1012 = vrot.lane.b32.xlu0 %v1010, 32
    %v1013 = vpop.permute.xlu0 %1012
    %1015 = vst.msk [vmem:[#allocation2] sm:$0xc0] %vm382, %v1013
    %v1016 = vrot.slane %v1010, 6
    %1017 = vrot.lane.b32.xlu0 %v1016, 32
    %v1018 = vpop.permute.xlu0 %1017
    %v1019 = vsel %vm59, %v1018, 0
    %1021 = vmatpush.msra.mxu0 0.0
    %1022 = vmatpush.msra.mxu0 0.0
    %1023 = vmatpush.msra.mxu0 0.0
    %1024 = vmatpush.msra.mxu0 0.0
    %1025 = vmatpush.msra.mxu0 0.0
    %1026 = vmatpush.msra.mxu0 0.0
    %1027 = vmatpush.msra.mxu0 0.0
    %1028 = vmatpush.msra.mxu0 0.0
    %1029 = vmatpush.msra.mxu0 0.0
    %1030 = vmatpush.msra.mxu0 0.0
    %1031 = vmatpush.msra.mxu0 0.0
    %1032 = vmatpush.msra.mxu0 0.0
    %1033 = vmatpush.msra.mxu0 %v687
    %1034 = vmatpush.msra.mxu0 %v686
    %1035 = vmatpush.msra.mxu0 %v685
    %1036 = vmatpush.msra.mxu0 %v684
    %1037 = vmatmul.f32.gmra.mxu0 %v1019
    %v1038 = vpop.f32.mrf.mxu0
    %v1039 = vadd.f32 0.0, %v1038
    %1040 = vdwg.mxu0
    %v1041 = vadd.f32 %v721, %v1039
    %v1042 = vxor.u32 %v1041, 2147483648
    %v1043 = vmul.f32 %v1042, 1.442695
    %v1044 = vpow.pop %v1043
    %v1045 = vadd.f32 %v1044, 1.0
    %v1046 = vrcp.pop %v1045
    %v1047 = vmul.f32 %v1045, %v1046
    %v1048 = vsub.f32 1.0, %v1047
    %v1049 = vmul.f32 %v1046, %v1048
    %v1050 = vadd.f32 %v1046, %v1049
    %vm1051 = vweird.f32 %v1045
    %vm1052 = vweird.f32 %v1046
    %vm1053 = vmor %vm1051, %vm1052
    %v1054 = vsel %vm1053, %v1046, %v1050
    %v1055 = vand.u32 2147483647, %v1045
    %vm1056 = vcmp.eq.f32.partialorder %v1055, 8.507059e+37
    %v1057 = vand.u32 %v1045, 2147483648
    %v1058 = vor.u32 1.1754944e-38, %v1057
    %v1059 = vsel %vm1056, %v1058, %v1054
    %v1060 = vmul.f32 1.0, %v1059
    %v1061 = vtanh.pop %v1041
    %v1063 = vrot.slane %v1004, 6
    %v1065 = vmul.f32 %v1060, %v1063
    %1067 = vrot.lane.b32.xlu0 %v1061, 64
    %v1068 = vpop.permute.xlu0 %1067
    %v1070 = vmul.f32 %v1060, %v1068
    %1072 = vrot.lane.b32.xlu0 %v1070, 32
    %v1073 = vpop.permute.xlu0 %1072
    %v1075 = vadd.f32 %v1065, %v1073
    %v1076 = vtanh.pop %v1075
    %1078 = vrot.lane.b32.xlu0 %v1076, 64
    %v1079 = vpop.permute.xlu0 %1078
    %v1081 = vmul.f32 %v1060, %v1079
    %1083 = vrot.lane.b32.xlu0 %v1081, 32
    %v1084 = vpop.permute.xlu0 %1083
    %1086 = vst.msk [vmem:[#allocation2 + $0x8] sm:$0x3] %vm160, %v1084
    %v1087 = vsel %vm59, %v1084, 0
    %1089 = vmatpush.msra.mxu0 0.0
    %1090 = vmatpush.msra.mxu0 0.0
    %1091 = vmatpush.msra.mxu0 0.0
    %1092 = vmatpush.msra.mxu0 0.0
    %1093 = vmatpush.msra.mxu0 0.0
    %1094 = vmatpush.msra.mxu0 0.0
    %1095 = vmatpush.msra.mxu0 0.0
    %1096 = vmatpush.msra.mxu0 0.0
    %1097 = vmatpush.msra.mxu0 0.0
    %1098 = vmatpush.msra.mxu0 0.0
    %1099 = vmatpush.msra.mxu0 0.0
    %1100 = vmatpush.msra.mxu0 0.0
    %1101 = vmatpush.msra.mxu0 %v687
    %1102 = vmatpush.msra.mxu0 %v686
    %1103 = vmatpush.msra.mxu0 %v685
    %1104 = vmatpush.msra.mxu0 %v684
    %1105 = vmatmul.f32.gmra.mxu0 %v1087
    %v1106 = vpop.f32.mrf.mxu0
    %v1107 = vadd.f32 0.0, %v1106
    %1108 = vdwg.mxu0
    %v1110 = vrot.slane %v1107, 6
    %v1112 = vadd.f32 %v721, %v1110
    %v1113 = vxor.u32 %v1112, 2147483648
    %v1114 = vmul.f32 %v1113, 1.442695
    %v1115 = vpow.pop %v1114
    %v1116 = vadd.f32 %v1115, 1.0
    %v1117 = vrcp.pop %v1116
    %v1118 = vmul.f32 %v1116, %v1117
    %v1119 = vsub.f32 1.0, %v1118
    %v1120 = vmul.f32 %v1117, %v1119
    %v1121 = vadd.f32 %v1117, %v1120
    %vm1122 = vweird.f32 %v1116
    %vm1123 = vweird.f32 %v1117
    %vm1124 = vmor %vm1122, %vm1123
    %v1125 = vsel %vm1124, %v1117, %v1121
    %v1126 = vand.u32 2147483647, %v1116
    %vm1127 = vcmp.eq.f32.partialorder %v1126, 8.507059e+37
    %v1128 = vand.u32 %v1116, 2147483648
    %v1129 = vor.u32 1.1754944e-38, %v1128
    %v1130 = vsel %vm1127, %v1129, %v1125
    %v1131 = vmul.f32 1.0, %v1130
    %v1132 = vtanh.pop %v1112
    %v1134 = vrot.slane %v1075, 6
    %v1136 = vmul.f32 %v1131, %v1134
    %1138 = vrot.lane.b32.xlu0 %v1132, 64
    %v1139 = vpop.permute.xlu0 %1138
    %v1141 = vmul.f32 %v1131, %v1139
    %1143 = vrot.lane.b32.xlu0 %v1141, 32
    %v1144 = vpop.permute.xlu0 %1143
    %v1146 = vadd.f32 %v1136, %v1144
    %v1147 = vtanh.pop %v1146
    %1149 = vrot.lane.b32.xlu0 %v1147, 64
    %v1150 = vpop.permute.xlu0 %1149
    %v1152 = vmul.f32 %v1131, %v1150
    %1154 = vrot.lane.b32.xlu0 %v1152, 32
    %v1155 = vpop.permute.xlu0 %1154
    %1157 = vst.msk [vmem:[#allocation2 + $0x8] sm:$0xc] %vm232, %v1155
    %v1158 = vrot.slane %v1152, 2
    %1159 = vrot.lane.b32.xlu0 %v1158, 32
    %v1160 = vpop.permute.xlu0 %1159
    %v1161 = vsel %vm59, %v1160, 0
    %1163 = vmatpush.msra.mxu0 0.0
    %1164 = vmatpush.msra.mxu0 0.0
    %1165 = vmatpush.msra.mxu0 0.0
    %1166 = vmatpush.msra.mxu0 0.0
    %1167 = vmatpush.msra.mxu0 0.0
    %1168 = vmatpush.msra.mxu0 0.0
    %1169 = vmatpush.msra.mxu0 0.0
    %1170 = vmatpush.msra.mxu0 0.0
    %1171 = vmatpush.msra.mxu0 0.0
    %1172 = vmatpush.msra.mxu0 0.0
    %1173 = vmatpush.msra.mxu0 0.0
    %1174 = vmatpush.msra.mxu0 0.0
    %1175 = vmatpush.msra.mxu0 %v687
    %1176 = vmatpush.msra.mxu0 %v686
    %1177 = vmatpush.msra.mxu0 %v685
    %1178 = vmatpush.msra.mxu0 %v684
    %1179 = vmatmul.f32.gmra.mxu0 %v1161
    %v1180 = vpop.f32.mrf.mxu0
    %v1181 = vadd.f32 0.0, %v1180
    %1182 = vdwg.mxu0
    %v1184 = vrot.slane %v1181, 4
    %v1186 = vadd.f32 %v721, %v1184
    %v1187 = vxor.u32 %v1186, 2147483648
    %v1188 = vmul.f32 %v1187, 1.442695
    %v1189 = vpow.pop %v1188
    %v1190 = vadd.f32 %v1189, 1.0
    %v1191 = vrcp.pop %v1190
    %v1192 = vmul.f32 %v1190, %v1191
    %v1193 = vsub.f32 1.0, %v1192
    %v1194 = vmul.f32 %v1191, %v1193
    %v1195 = vadd.f32 %v1191, %v1194
    %vm1196 = vweird.f32 %v1190
    %vm1197 = vweird.f32 %v1191
    %vm1198 = vmor %vm1196, %vm1197
    %v1199 = vsel %vm1198, %v1191, %v1195
    %v1200 = vand.u32 2147483647, %v1190
    %vm1201 = vcmp.eq.f32.partialorder %v1200, 8.507059e+37
    %v1202 = vand.u32 %v1190, 2147483648
    %v1203 = vor.u32 1.1754944e-38, %v1202
    %v1204 = vsel %vm1201, %v1203, %v1199
    %v1205 = vmul.f32 1.0, %v1204
    %v1206 = vtanh.pop %v1186
    %v1208 = vrot.slane %v1146, 6
    %v1210 = vmul.f32 %v1205, %v1208
    %1212 = vrot.lane.b32.xlu0 %v1206, 64
    %v1213 = vpop.permute.xlu0 %1212
    %v1215 = vmul.f32 %v1205, %v1213
    %1217 = vrot.lane.b32.xlu0 %v1215, 32
    %v1218 = vpop.permute.xlu0 %1217
    %v1220 = vadd.f32 %v1210, %v1218
    %v1221 = vtanh.pop %v1220
    %1223 = vrot.lane.b32.xlu0 %v1221, 64
    %v1224 = vpop.permute.xlu0 %1223
    %v1226 = vmul.f32 %v1205, %v1224
    %1228 = vrot.lane.b32.xlu0 %v1226, 32
    %v1229 = vpop.permute.xlu0 %1228
    %1231 = vst.msk [vmem:[#allocation2 + $0x8] sm:$0x30] %vm307, %v1229
    %v1232 = vrot.slane %v1226, 4
    %1233 = vrot.lane.b32.xlu0 %v1232, 32
    %v1234 = vpop.permute.xlu0 %1233
    %v1235 = vsel %vm59, %v1234, 0
    %1237 = vmatpush.msra.mxu0 0.0
    %1238 = vmatpush.msra.mxu0 0.0
    %1239 = vmatpush.msra.mxu0 0.0
    %1240 = vmatpush.msra.mxu0 0.0
    %1241 = vmatpush.msra.mxu0 0.0
    %1242 = vmatpush.msra.mxu0 0.0
    %1243 = vmatpush.msra.mxu0 0.0
    %1244 = vmatpush.msra.mxu0 0.0
    %1245 = vmatpush.msra.mxu0 0.0
    %1246 = vmatpush.msra.mxu0 0.0
    %1247 = vmatpush.msra.mxu0 0.0
    %1248 = vmatpush.msra.mxu0 0.0
    %1249 = vmatpush.msra.mxu0 %v687
    %1250 = vmatpush.msra.mxu0 %v686
    %1251 = vmatpush.msra.mxu0 %v685
    %1252 = vmatpush.msra.mxu0 %v684
    %1253 = vmatmul.f32.gmra.mxu0 %v1235
    %v1254 = vpop.f32.mrf.mxu0
    %v1255 = vadd.f32 0.0, %v1254
    %1256 = vdwg.mxu0
    %v1258 = vrot.slane %v1255, 2
    %v1260 = vadd.f32 %v721, %v1258
    %v1261 = vxor.u32 %v1260, 2147483648
    %v1262 = vmul.f32 %v1261, 1.442695
    %v1263 = vpow.pop %v1262
    %v1264 = vadd.f32 %v1263, 1.0
    %v1265 = vrcp.pop %v1264
    %v1266 = vmul.f32 %v1264, %v1265
    %v1267 = vsub.f32 1.0, %v1266
    %v1268 = vmul.f32 %v1265, %v1267
    %v1269 = vadd.f32 %v1265, %v1268
    %vm1270 = vweird.f32 %v1264
    %vm1271 = vweird.f32 %v1265
    %vm1272 = vmor %vm1270, %vm1271
    %v1273 = vsel %vm1272, %v1265, %v1269
    %v1274 = vand.u32 2147483647, %v1264
    %vm1275 = vcmp.eq.f32.partialorder %v1274, 8.507059e+37
    %v1276 = vand.u32 %v1264, 2147483648
    %v1277 = vor.u32 1.1754944e-38, %v1276
    %v1278 = vsel %vm1275, %v1277, %v1273
    %v1279 = vmul.f32 1.0, %v1278
    %v1280 = vtanh.pop %v1260
    %v1282 = vrot.slane %v1220, 6
    %v1284 = vmul.f32 %v1279, %v1282
    %1286 = vrot.lane.b32.xlu0 %v1280, 64
    %v1287 = vpop.permute.xlu0 %1286
    %v1289 = vmul.f32 %v1279, %v1287
    %1291 = vrot.lane.b32.xlu0 %v1289, 32
    %v1292 = vpop.permute.xlu0 %1291
    %v1294 = vadd.f32 %v1284, %v1292
    %v1295 = vtanh.pop %v1294
    %1297 = vrot.lane.b32.xlu0 %v1295, 64
    %v1298 = vpop.permute.xlu0 %1297
    %v1300 = vmul.f32 %v1279, %v1298
    %1302 = vrot.lane.b32.xlu0 %v1300, 32
    %v1303 = vpop.permute.xlu0 %1302
    %1305 = vst.msk [vmem:[#allocation2 + $0x8] sm:$0xc0] %vm382, %v1303
    %s1306 = scalar_lea.vmem [#allocation4], 2
    %1307 = vst.msk [vmem:[%s1306 - $0x6] sm:$0xc0] %vm382, %v1303
    %1309 = vrot.lane.b32.xlu0 %v1294, 96
    %v1310 = vpop.permute.xlu0 %1309
    %s1312 = scalar_lea.vmem [#allocation6], 2
    %1313 = vst.msk [vmem:[%s1312 - $0x6] sm:$0xc0] %vm382, %v1310
    %v1314 = vld [vmem:[#allocation2 + $0x6] sm:$0xff]
    %v1315 = vld [vmem:[#allocation2 + $0xe] sm:$0x3]
    %v1316 = vld [vmem:[%s9] sm:$0x1]
    %v1318 = vperm.slane %v1316, 0
    %v1320 = vmul.f32 %v1314, %v1318
    %v1321 = vmul.f32 %v1315, %v1318
    %v1322 = vsel %vm59, %v1320, 0.0
    %1323 = vadd.xlane.f32.xlu0 %v1322
    %v1324 = vpop.xlane.xlu0 %1323
    %v1325 = vsel %vm160, %v1321, 0.0
    %1326 = vadd.xlane.f32.xlu0 %v1325
    %v1327 = vpop.xlane.xlu0 %1326
    %v1328 = vld [vmem:[#allocation3] sm:$0x1]
    %v1330 = vperm.slane %v1328, 0
    %v1332 = vadd.f32 %v1324, %v1330
    %v1333 = vadd.f32 %v1327, %v1330
    %v1334 = vxor.u32 %v1332, 2147483648
    %v1335 = vxor.u32 %v1333, 2147483648
    %v1336 = vmul.f32 %v1334, 1.442695
    %v1337 = vpow.pop %v1336
    %v1338 = vmul.f32 %v1335, 1.442695
    %v1339 = vpow.pop %v1338
    %v1340 = vadd.f32 %v1337, 1.0
    %v1341 = vadd.f32 %v1339, 1.0
    %v1342 = vrcp.pop %v1340
    %v1343 = vmul.f32 %v1340, %v1342
    %v1344 = vsub.f32 1.0, %v1343
    %v1345 = vmul.f32 %v1342, %v1344
    %v1346 = vadd.f32 %v1342, %v1345
    %vm1347 = vweird.f32 %v1340
    %vm1348 = vweird.f32 %v1342
    %vm1349 = vmor %vm1347, %vm1348
    %v1350 = vsel %vm1349, %v1342, %v1346
    %v1351 = vand.u32 2147483647, %v1340
    %vm1352 = vcmp.eq.f32.partialorder %v1351, 8.507059e+37
    %v1353 = vand.u32 %v1340, 2147483648
    %v1354 = vor.u32 1.1754944e-38, %v1353
    %v1355 = vsel %vm1352, %v1354, %v1350
    %v1356 = vmul.f32 1.0, %v1355
    %v1357 = vrcp.pop %v1341
    %v1358 = vmul.f32 %v1341, %v1357
    %v1359 = vsub.f32 1.0, %v1358
    %v1360 = vmul.f32 %v1357, %v1359
    %v1361 = vadd.f32 %v1357, %v1360
    %vm1362 = vweird.f32 %v1341
    %vm1363 = vweird.f32 %v1357
    %vm1364 = vmor %vm1362, %vm1363
    %v1365 = vsel %vm1364, %v1357, %v1361
    %v1366 = vand.u32 2147483647, %v1341
    %vm1367 = vcmp.eq.f32.partialorder %v1366, 8.507059e+37
    %v1368 = vand.u32 %v1341, 2147483648
    %v1369 = vor.u32 1.1754944e-38, %v1368
    %v1370 = vsel %vm1367, %v1369, %v1365
    %v1371 = vmul.f32 1.0, %v1370
    %vm1372 = vcmask 7168
    %1373 = vst.msk [vmem:[%s11] sm:$0xff] %vm1372, %v1356
    %vm1374 = vcmask 1024
    %1375 = vst.msk [vmem:[%s11 + $0x8] sm:$0x3] %vm1374, %v1371
    // Predicated region
    $region46: #{sentiment_rnn_forward.1} parent=1 // pred_check
      _
    $region47: #{sentiment_rnn_forward.1} parent=1 // pred_check_branch
      %1377 = sbr.rel (0) target = $region49
    $region48: #{sentiment_rnn_forward.1} parent=1 // pred_region
      _
    $region49: #{sentiment_rnn_forward.1} parent=1 // pred_fallthru
      _
    // Predicated region
    $region50: #{sentiment_rnn_forward.1} parent=1 // pred_check
      _
    $region51: #{sentiment_rnn_forward.1} parent=1 // pred_check_branch
      %1379 = sbr.rel (0) target = $region53
    $region52: #{sentiment_rnn_forward.1} parent=1 // pred_region
      %1381 = vsyncadd [#allocation5], 0
      %s1382 = sshll.u32 [#allocation4], 4
      %s1383 = int_to_ptr.vmem [resolvable:$true] %s1382
      %s1384 = sshll.u32 %s12, 4
      %s1385 = int_to_ptr.hbm [resolvable:$true] %s1384
      %1390 = dma.vmem_to_hbm [thread:$0]  %s1383, 64, %s1385, [#allocation5], 32, 32, 2
    $region53: #{sentiment_rnn_forward.1} parent=1 // pred_fallthru
      _
    // Predicated region
    $region54: #{sentiment_rnn_forward.1} parent=1 // pred_check
      _
    $region55: #{sentiment_rnn_forward.1} parent=1 // pred_check_branch
      %1392 = sbr.rel (0) target = $region57
    $region56: #{sentiment_rnn_forward.1} parent=1 // pred_region
      %1394 = vsyncadd [#allocation7], 0
      %s1395 = sshll.u32 [#allocation6], 4
      %s1396 = int_to_ptr.vmem [resolvable:$true] %s1395
      %s1397 = sshll.u32 %s13, 4
      %s1398 = int_to_ptr.hbm [resolvable:$true] %s1397
      %1403 = dma.vmem_to_hbm [thread:$0]  %s1396, 64, %s1398, [#allocation7], 32, 32, 2
    $region57: #{sentiment_rnn_forward.1} parent=1 // pred_fallthru
      _
    // Predicated region
    $region58: #{sentiment_rnn_forward.1} parent=1 // pred_check
      _
    $region59: #{sentiment_rnn_forward.1} parent=1 // pred_check_branch
      %1405 = sbr.rel (0) target = $region61
    $region60: #{sentiment_rnn_forward.1} parent=1 // pred_region
      _
    $region61: #{sentiment_rnn_forward.1} parent=1 // pred_fallthru
      _
    // Predicated region
    $region62: #{sentiment_rnn_forward.1} parent=1 // pred_check
      _
    $region63: #{sentiment_rnn_forward.1} parent=1 // pred_check_branch
      %1407 = sbr.rel (0) target = $region65
    $region64: #{sentiment_rnn_forward.1} parent=1 // pred_region
      %1409 = dma.done [#allocation5], 64
    $region65: #{sentiment_rnn_forward.1} parent=1 // pred_fallthru
      _
    // Predicated region
    $region66: #{sentiment_rnn_forward.1} parent=1 // pred_check
      _
    $region67: #{sentiment_rnn_forward.1} parent=1 // pred_check_branch
      %1411 = sbr.rel (0) target = $region69
    $region68: #{sentiment_rnn_forward.1} parent=1 // pred_region
      %1413 = dma.done [#allocation7], 64
    $region69: #{sentiment_rnn_forward.1} parent=1 // pred_fallthru
      _
    %1414 = vsyncpa [#allocation5], 1
    %1415 = vsyncpa [#allocation7], 1

</llo_original>
